<compile_context>
chip_gen: v5e
topology: v5e:2x2
jax: 0.10.0
libtpu: 0.0.40
codegen_flags: <defaults>
</compile_context>

<pallas_src>
import jax
import jax.numpy as jnp
from jax.experimental import pallas as pl
from jax.experimental.pallas import tpu as pltpu


# ----------------------------------------------------------------------------
# Pallas kernel: fused periodic conv (per-image)
# ----------------------------------------------------------------------------
def _periodic_conv_kernel(x_ref, w_ref, b_ref, o_ref):
    # x_ref: (1, Hp, Wp*Cin)      one circular-padded image, (W, C) flattened on lanes
    # w_ref: (kh, Wp*Cin, Wo*Cout) block-banded weights (resident across grid steps)
    # b_ref: (1, Wo*Cout)          bias pre-tiled across Wo (f32)
    # o_ref: (1, Ho, Wo*Cout)      lane-dense output slab (f32)
    ho = o_ref.shape[1]
    kh = w_ref.shape[0]
    x = x_ref[0]                                        # (Hp, Wp*Cin), bf16
    acc = jnp.zeros(o_ref.shape[1:], jnp.float32)       # f32 accumulator
    for i in range(kh):                                  # static, unrolled (kh small)
        acc = acc + jnp.dot(x[i:i + ho, :], w_ref[i],
                            preferred_element_type=jnp.float32)
    o_ref[0] = acc + b_ref[...]                          # bias epilogue, f32


# ----------------------------------------------------------------------------
# Wrapper: PyTorch-compatible NCHW / OIHW interface
# ----------------------------------------------------------------------------
def periodic_conv2d(x_nchw, weight_oihw, bias, padding, *, mxu_dtype=jnp.bfloat16):
    """PeriodicConv2d.forward: circular pad by `padding`, then valid Conv2d (stride=1)."""
    # TODO(synk): stride != 1, dilation != 1, groups != 1 paths of nn.Conv2d are not
    #             implemented (module defaults only).
    b, cin, h, w = x_nchw.shape
    cout, cin_w, kh, kw = weight_oihw.shape
    assert cin == cin_w, (cin, cin_w)
    p = int(padding)
    hp, wp = h + 2 * p, w + 2 * p
    ho, wo = hp - kh + 1, wp - kw + 1

    # --- activation: NHWC, circular pad (jnp 'wrap' == torch 'circular'), lane-flatten
    x_nhwc = jnp.transpose(x_nchw, (0, 2, 3, 1))                      # (B, H, W, Cin)
    x_pad = jnp.pad(x_nhwc, ((0, 0), (p, p), (p, p), (0, 0)), mode="wrap")
    x2 = x_pad.reshape(b, hp, wp * cin).astype(mxu_dtype)             # (B, Hp, Wp*Cin)

    # --- block-banded weight: Wmat[i, pcol*Cin + c, wo*Cout + o] = w[o, c, i, pcol - wo]
    w_t = jnp.transpose(weight_oihw, (2, 3, 1, 0))                    # (kh, kw, Cin, Cout)
    pcol = jnp.arange(wp)[:, None]                                    # (Wp, 1)
    ocol = jnp.arange(wo)[None, :]                                    # (1, Wo)
    j_idx = pcol - ocol                                               # (Wp, Wo)
    valid = ((j_idx >= 0) & (j_idx < kw)).astype(w_t.dtype)
    jc = jnp.clip(j_idx, 0, kw - 1)
    big = w_t[:, jc] * valid[None, :, :, None, None]                  # (kh, Wp, Wo, Cin, Cout)
    wmat = (jnp.transpose(big, (0, 1, 3, 2, 4))
            .reshape(kh, wp * cin, wo * cout)
            .astype(mxu_dtype))                                       # (kh, Wp*Cin, Wo*Cout)

    # --- per-channel bias pre-tiled across Wo -> lane-dense epilogue add
    bias_tiled = jnp.tile(bias.astype(jnp.float32), (wo,)).reshape(1, wo * cout)

    y2 = pl.pallas_call(
        _periodic_conv_kernel,
        out_shape=jax.ShapeDtypeStruct((b, ho, wo * cout), jnp.float32),
        grid_spec=pltpu.PrefetchScalarGridSpec(
            num_scalar_prefetch=0,
            grid=(b,),
            in_specs=[
                pl.BlockSpec((1, hp, wp * cin), lambda i: (i, 0, 0)),
                pl.BlockSpec((kh, wp * cin, wo * cout), lambda i: (0, 0, 0)),
                pl.BlockSpec((1, wo * cout), lambda i: (0, 0)),
            ],
            out_specs=pl.BlockSpec((1, ho, wo * cout), lambda i: (i, 0, 0)),
        ),
        compiler_params=pltpu.CompilerParams(
            dimension_semantics=("parallel",),   # batch across TCs on v7x
        ),
    )(x2, wmat, bias_tiled)

    y = y2.reshape(b, ho, wo, cout)
    return jnp.transpose(y, (0, 3, 1, 2))                             # back to NCHW


# ----------------------------------------------------------------------------
# Pure-JAX reference (f32, highest precision) for correctness check
# ----------------------------------------------------------------------------
def _reference(x_nchw, weight_oihw, bias, padding):
    p = int(padding)
    xp = jnp.pad(x_nchw, ((0, 0), (0, 0), (p, p), (p, p)), mode="wrap")
    y = jax.lax.conv_general_dilated(
        xp, weight_oihw, window_strides=(1, 1), padding="VALID",
        dimension_numbers=("NCHW", "OIHW", "NCHW"),
        precision=jax.lax.Precision.HIGHEST)
    return y + bias.reshape(1, -1, 1, 1)


if __name__ == "__main__":
    B, Cin, H, W = 2, 16, 16, 16
    Cout, K, P = 32, 3, 1

    key = jax.random.PRNGKey(0)
    kx, kw_, kb = jax.random.split(key, 3)
    x = jax.random.normal(kx, (B, Cin, H, W), jnp.float32)
    w = 0.05 * jax.random.normal(kw_, (Cout, Cin, K, K), jnp.float32)
    b = 0.05 * jax.random.normal(kb, (Cout,), jnp.float32)

    fwd = jax.jit(lambda x_, w_, b_: periodic_conv2d(x_, w_, b_, padding=P))
    out = jax.block_until_ready(fwd(x, w, b))

    assert out.shape == (B, Cout, H, W), out.shape   # circular pad preserves H, W
    assert bool(jnp.all(jnp.isfinite(out)))

    ref = _reference(x, w, b, P)
    max_err = float(jnp.max(jnp.abs(out - ref)))
    assert max_err < 5e-2, f"max abs err vs reference: {max_err}"

    print("KERNEL_OK")
</pallas_src>

<mosaic_0001>
module attributes {stable_mosaic.version = 11 : i64} {
  func.func @_periodic_conv_kernel(%arg0: i32, %arg1: memref<1x18x288xbf16, #tpu.memory_space<vmem>>, %arg2: memref<3x288x512xbf16, #tpu.memory_space<vmem>>, %arg3: memref<1x512xf32, #tpu.memory_space<vmem>>, %arg4: memref<1x16x512xf32, #tpu.memory_space<vmem>>) attributes {dimension_semantics = [#tpu.dimension_semantics<parallel>], iteration_bounds = array<i64: 2>, scalar_prefetch = 0 : i64, scratch_operands = 0 : i64, tpu.core_type = #tpu.core_type<tc>, window_params = [{transform_indices = @transform_0, window_bounds = array<i64: 1, 18, 288>}, {pipeline_mode = #tpu.pipeline_mode<synchronous>, transform_indices = @transform_1, window_bounds = array<i64: 3, 288, 512>}, {pipeline_mode = #tpu.pipeline_mode<synchronous>, transform_indices = @transform_2, window_bounds = array<i64: 1, 512>}, {transform_indices = @transform_3, window_bounds = array<i64: 1, 16, 512>}]} {
    %c0 = arith.constant 0 : index
    %c0_0 = arith.constant 0 : index
    %c0_1 = arith.constant 0 : index
    %0 = vector.load %arg1[%c0, %c0_0, %c0_1] : memref<1x18x288xbf16, #tpu.memory_space<vmem>>, vector<1x18x288xbf16>
    %1 = vector.shape_cast %0 : vector<1x18x288xbf16> to vector<18x288xbf16>
    %cst = arith.constant 0.000000e+00 : f32
    %2 = vector.broadcast %cst : f32 to vector<16x512xf32>
    %3 = vector.extract_strided_slice %1 {offsets = [0, 0], sizes = [16, 288], strides = [1, 1]} : vector<18x288xbf16> to vector<16x288xbf16>
    %c0_2 = arith.constant 0 : index
    %c0_3 = arith.constant 0 : index
    %c0_4 = arith.constant 0 : index
    %4 = vector.load %arg2[%c0_2, %c0_3, %c0_4] : memref<3x288x512xbf16, #tpu.memory_space<vmem>>, vector<1x288x512xbf16>
    %5 = vector.shape_cast %4 : vector<1x288x512xbf16> to vector<288x512xbf16>
    %cst_5 = arith.constant dense<0.000000e+00> : vector<16x512xf32>
    %6 = tpu.matmul %3, %5, %cst_5 {dimension_numbers = #tpu.dot_dimension_numbers<[1], [0], [0], [1], [0, 0, 1, 1], [], []>} : vector<16x288xbf16>, vector<288x512xbf16>, vector<16x512xf32> -> vector<16x512xf32>
    %7 = arith.addf %2, %6 : vector<16x512xf32>
    %8 = vector.extract_strided_slice %1 {offsets = [1, 0], sizes = [16, 288], strides = [1, 1]} : vector<18x288xbf16> to vector<16x288xbf16>
    %c1 = arith.constant 1 : index
    %c0_6 = arith.constant 0 : index
    %c0_7 = arith.constant 0 : index
    %9 = vector.load %arg2[%c1, %c0_6, %c0_7] : memref<3x288x512xbf16, #tpu.memory_space<vmem>>, vector<1x288x512xbf16>
    %10 = vector.shape_cast %9 : vector<1x288x512xbf16> to vector<288x512xbf16>
    %cst_8 = arith.constant dense<0.000000e+00> : vector<16x512xf32>
    %11 = tpu.matmul %8, %10, %cst_8 {dimension_numbers = #tpu.dot_dimension_numbers<[1], [0], [0], [1], [0, 0, 1, 1], [], []>} : vector<16x288xbf16>, vector<288x512xbf16>, vector<16x512xf32> -> vector<16x512xf32>
    %12 = arith.addf %7, %11 : vector<16x512xf32>
    %13 = vector.extract_strided_slice %1 {offsets = [2, 0], sizes = [16, 288], strides = [1, 1]} : vector<18x288xbf16> to vector<16x288xbf16>
    %c2 = arith.constant 2 : index
    %c0_9 = arith.constant 0 : index
    %c0_10 = arith.constant 0 : index
    %14 = vector.load %arg2[%c2, %c0_9, %c0_10] : memref<3x288x512xbf16, #tpu.memory_space<vmem>>, vector<1x288x512xbf16>
    %15 = vector.shape_cast %14 : vector<1x288x512xbf16> to vector<288x512xbf16>
    %cst_11 = arith.constant dense<0.000000e+00> : vector<16x512xf32>
    %16 = tpu.matmul %13, %15, %cst_11 {dimension_numbers = #tpu.dot_dimension_numbers<[1], [0], [0], [1], [0, 0, 1, 1], [], []>} : vector<16x288xbf16>, vector<288x512xbf16>, vector<16x512xf32> -> vector<16x512xf32>
    %17 = arith.addf %12, %16 : vector<16x512xf32>
    %c0_12 = arith.constant 0 : index
    %c0_13 = arith.constant 0 : index
    %18 = vector.load %arg3[%c0_12, %c0_13] : memref<1x512xf32, #tpu.memory_space<vmem>>, vector<1x512xf32>
    %19 = vector.broadcast %18 : vector<1x512xf32> to vector<16x512xf32>
    %20 = arith.addf %17, %19 : vector<16x512xf32>
    %c0_14 = arith.constant 0 : index
    %c0_15 = arith.constant 0 : index
    %c0_16 = arith.constant 0 : index
    %21 = vector.load %arg4[%c0_14, %c0_15, %c0_16] : memref<1x16x512xf32, #tpu.memory_space<vmem>>, vector<1x16x512xf32>
    %22 = vector.shape_cast %21 : vector<1x16x512xf32> to vector<16x512xf32>
    %23 = vector.shape_cast %20 : vector<16x512xf32> to vector<1x16x512xf32>
    tpu.vector_store %arg4[%c0_14, %c0_15, %c0_16], %23 {strides = array<i32>} : memref<1x16x512xf32, #tpu.memory_space<vmem>>, vector<1x16x512xf32>,
    return
  }
  func.func @transform_0(%arg0: i32) -> (i32, i32, i32) {
    %c0_i32 = arith.constant 0 : i32
    %c0_i32_0 = arith.constant 0 : i32
    %c0_i32_1 = arith.constant 0 : i32
    return %arg0, %c0_i32, %c0_i32_0 : i32, i32, i32
  }
  func.func @transform_1(%arg0: i32) -> (i32, i32, i32) {
    %c0_i32 = arith.constant 0 : i32
    %c0_i32_0 = arith.constant 0 : i32
    %c0_i32_1 = arith.constant 0 : i32
    %c0_i32_2 = arith.constant 0 : i32
    return %c0_i32, %c0_i32_0, %c0_i32_1 : i32, i32, i32
  }
  func.func @transform_2(%arg0: i32) -> (i32, i32) {
    %c0_i32 = arith.constant 0 : i32
    %c0_i32_0 = arith.constant 0 : i32
    %c0_i32_1 = arith.constant 0 : i32
    return %c0_i32, %c0_i32_0 : i32, i32
  }
  func.func @transform_3(%arg0: i32) -> (i32, i32, i32) {
    %c0_i32 = arith.constant 0 : i32
    %c0_i32_0 = arith.constant 0 : i32
    %c0_i32_1 = arith.constant 0 : i32
    return %arg0, %c0_i32, %c0_i32_0 : i32, i32, i32
  }
}

</mosaic_0001>

<llo_original>
// kernel: tile.8
$region0: #{tile.8}
  #allocation0 [shape = 's32[1]{0}', space=sflag, size = 0x4, scoped, tag = 'scoped memory for tile.8']
  %s0 = inlined_call_operand.vmem [shape: f32[32], index: 0, kind: input, shape index: {}]
  %s1 = inlined_call_operand.vmem [shape: f32[16,32], index: 1, kind: output, shape index: {}]
  // Predicated region
  $region2: #{tile.8} parent=0 // pred_check
    _
  $region3: #{tile.8} parent=0 // pred_check_branch
    %3 = sbr.rel (0) target = $region5
  $region4: #{tile.8} parent=0 // pred_region
    _
  $region5: #{tile.8} parent=0 // pred_fallthru
    _
  %v4 = vld [vmem:[%s0] ss:$0 sm:$0xff]
  %5 = vst [vmem:[%s1] sm:$0xff] %v4
  %s6 = scalar_lea.vmem %s1, 8
  %7 = vst [vmem:[%s6] sm:$0xff] %v4

// kernel: tile.9
$region0: #{tile.9}
  %s0 = inlined_call_operand.vmem [shape: f32[16,32], index: 0, kind: input, shape index: {}]
  %s1 = inlined_call_operand.vmem [shape: f32[1,512], index: 1, kind: output, shape index: {}]
  $region1: #{tile.9} parent=0
    #allocation0 [shape = 'u8[16384]{0}', space=vmem, size = 0x4000, scoped, tag = 'scoped mem for output reshape']
    %v2 = vld [vmem:[%s0] ss:$4 sm:$0xf]
    %vm3 = vcmask 261120
    %4 = vst.msk [vmem:[#allocation0] ss:$8 sm:$0xf] %vm3, %v2
    %s5 = scalar_lea.vmem %s0, 3
    %v6 = vld [vmem:[%s5] ss:$4 sm:$0xf]
    %7 = vrot.lane.b32.xlu0 %v6, 96
    %v8 = vpop.permute.xlu0 %7
    %vm9 = vcmask 1048320
    %10 = vst.msk [vmem:[#allocation0] ss:$8 sm:$0xf] %vm9, %v8
    %s11 = scalar_lea.vmem %s0, 2
    %v12 = vld [vmem:[%s11] ss:$4 sm:$0xf]
    %13 = vrot.lane.b32.xlu0 %v12, 64
    %v14 = vpop.permute.xlu0 %13
    %vm15 = vcmask 785920
    %16 = vst.msk [vmem:[#allocation0] ss:$8 sm:$0xf] %vm15, %v14
    %s17 = scalar_lea.vmem %s0, 1
    %v18 = vld [vmem:[%s17] ss:$4 sm:$0xf]
    %19 = vrot.lane.b32.xlu0 %v18, 32
    %v20 = vpop.permute.xlu0 %19
    %vm21 = vcmask 523520
    %22 = vst.msk [vmem:[#allocation0] ss:$8 sm:$0xf] %vm21, %v20
    %s24 = ssub.s32 2, 1
    %v25 = vld [vmem:[#allocation0] sm:%s24]
    %s27 = ssub.s32 2, 1
    %28 = vst [vmem:[%s1] sm:%s27] %v25
    %s29 = scalar_lea.vmem [#allocation0], 8
    %v30 = vld [vmem:[%s29] sm:%s24]
    %s32 = ssub.s32 2, 1
    %s33 = scalar_lea.vmem %s1, 1
    %34 = vst [vmem:[%s33] sm:%s32] %v30
    %s35 = scalar_lea.vmem [#allocation0], 16
    %v36 = vld [vmem:[%s35] sm:%s24]
    %s38 = ssub.s32 2, 1
    %s39 = scalar_lea.vmem %s1, 2
    %40 = vst [vmem:[%s39] sm:%s38] %v36
    %s41 = scalar_lea.vmem [#allocation0], 24
    %v42 = vld [vmem:[%s41] sm:%s24]
    %s44 = ssub.s32 2, 1
    %s45 = scalar_lea.vmem %s1, 3
    %46 = vst [vmem:[%s45] sm:%s44] %v42

// kernel: _lambda_.1
$region0: #{_lambda_.1}
  #allocation0 [shape = 'u32[]', space=smem, size = 0x4, offset = 0x4, fixed_abs, tag = 'smem constant byte address 0x4 - core index']
  #allocation1 [shape = 'u32[72,128]{1,0:T(1,128)}', space=vmem, size = 0x9000, scoped, tag = 'internal scratch']
  %s0 = inlined_call_operand.vmem [shape: bf16[2,18,288], index: 0, kind: input, shape index: {}]
  %s1 = inlined_call_operand.vmem [shape: bf16[3,288,512], index: 1, kind: input, shape index: {}]
  %s2 = inlined_call_operand.vmem [shape: f32[1,512], index: 2, kind: input, shape index: {}]
  %s3 = inlined_call_operand.vmem [shape: f32[2,16,512], index: 3, kind: output, shape index: {}]
  %s4 = sld [smem:[#allocation0]]
  $region45: #{_lambda_.1} parent=0
    _
  %s6 = ssub.s32 1, %s4
  %s7 = scalar_select 0, %s6, %s4
  loop: start=0, step=1, limit=4
  $region2: #{_lambda_.1} parent=0 // loop_pre_header
    _
  $region3: #{_lambda_.1} parent=0 // loop_header
    %s9 = sphi 0, %s13
    %p10 = scmp.ge.s32.totalorder %s9, 4
    %s19 = sphi 0, %s21
    %s22 = sphi 0, %s19
    %s23 = sphi 0, %s22
    %s39 = sphi 0, %s23
    %s43 = sphi 0, %s43
    %s45 = sphi 0, %s43
    %s46 = sphi 0, %s45
    %s60 = sphi 0, %s46
    %s64 = sphi 0, %s64
    %s66 = sphi 0, %s64
    %s67 = sphi 0, %s66
    %s81 = sphi 0, %s67
    %s87 = sphi 0, %s89
    %s90 = sphi 0, %s87
    %s91 = sphi 0, %s90
    %s107 = sphi 0, %s91
  $region4: #{_lambda_.1} parent=0 // loop_header_branch
    %12 = sbr.rel (%p10) target = $region8
  $region5: #{_lambda_.1} parent=0 // loop_body
    %s14 = ssub.s32 %s9, 1
    %s15 = ssub.s32 %s9, 2
    %s16 = sadd.s32 %s9, 1
    %s17 = ssub.s32 %s9, %s16
    %p18 = scmp.eq.s32.totalorder %s17, 0
    %s20 = sadd.s32 %s19, 1
    %s21 = scalar_select %p18, %s19, %s20
    %p24 = pneg %p18
    %p25 = scmp.eq.s32.totalorder %s9, 1
    %p26 = por %p24, %p25
    %p27 = scmp.ne.s32.totalorder %s19, %s22
    %p28 = scmp.eq.s32.totalorder %s9, 0
    %p29 = por %p27, %p28
    %p30 = scmp.ne.s32.totalorder %s19, %s22
    %p31 = scmp.eq.s32.totalorder %s14, 1
    %p32 = por %p30, %p31
    %p33 = scmp.ne.s32.totalorder %s22, %s23
    %p34 = scmp.eq.s32.totalorder %s14, 0
    %p35 = por %p33, %p34
    %p36 = scmp.ne.s32.totalorder %s22, %s23
    %p37 = scmp.eq.s32.totalorder %s15, 1
    %p38 = por %p36, %p37
    %p40 = scmp.ne.s32.totalorder %s23, %s39
    %p41 = scmp.eq.s32.totalorder %s15, 0
    %p42 = por %p40, %p41
    %s44 = sadd.s32 %s43, 1
    %p47 = scmp.eq.s32.totalorder %s9, 1
    %p48 = scmp.ne.s32.totalorder %s43, %s45
    %p49 = scmp.eq.s32.totalorder %s9, 0
    %p50 = por %p48, %p49
    %p51 = scmp.ne.s32.totalorder %s43, %s45
    %p52 = scmp.eq.s32.totalorder %s14, 1
    %p53 = por %p51, %p52
    %p54 = scmp.ne.s32.totalorder %s45, %s46
    %p55 = scmp.eq.s32.totalorder %s14, 0
    %p56 = por %p54, %p55
    %p57 = scmp.ne.s32.totalorder %s45, %s46
    %p58 = scmp.eq.s32.totalorder %s15, 1
    %p59 = por %p57, %p58
    %p61 = scmp.ne.s32.totalorder %s46, %s60
    %p62 = scmp.eq.s32.totalorder %s15, 0
    %p63 = por %p61, %p62
    %s65 = sadd.s32 %s64, 1
    %p68 = scmp.eq.s32.totalorder %s9, 1
    %p69 = scmp.ne.s32.totalorder %s64, %s66
    %p70 = scmp.eq.s32.totalorder %s9, 0
    %p71 = por %p69, %p70
    %p72 = scmp.ne.s32.totalorder %s64, %s66
    %p73 = scmp.eq.s32.totalorder %s14, 1
    %p74 = por %p72, %p73
    %p75 = scmp.ne.s32.totalorder %s66, %s67
    %p76 = scmp.eq.s32.totalorder %s14, 0
    %p77 = por %p75, %p76
    %p78 = scmp.ne.s32.totalorder %s66, %s67
    %p79 = scmp.eq.s32.totalorder %s15, 1
    %p80 = por %p78, %p79
    %p82 = scmp.ne.s32.totalorder %s67, %s81
    %p83 = scmp.eq.s32.totalorder %s15, 0
    %p84 = por %p82, %p83
    %s85 = ssub.s32 %s9, %s16
    %p86 = scmp.eq.s32.totalorder %s85, 0
    %s88 = sadd.s32 %s87, 1
    %s89 = scalar_select %p86, %s87, %s88
    %p92 = pneg %p86
    %p93 = scmp.eq.s32.totalorder %s9, 1
    %p94 = por %p92, %p93
    %p95 = scmp.ne.s32.totalorder %s87, %s90
    %p96 = scmp.eq.s32.totalorder %s9, 0
    %p97 = por %p95, %p96
    %p98 = scmp.ne.s32.totalorder %s87, %s90
    %p99 = scmp.eq.s32.totalorder %s14, 1
    %p100 = por %p98, %p99
    %p101 = scmp.ne.s32.totalorder %s90, %s91
    %p102 = scmp.eq.s32.totalorder %s14, 0
    %p103 = por %p101, %p102
    %p104 = scmp.ne.s32.totalorder %s90, %s91
    %p105 = scmp.eq.s32.totalorder %s15, 1
    %p106 = por %p104, %p105
    %p108 = scmp.ne.s32.totalorder %s91, %s107
    %p109 = scmp.eq.s32.totalorder %s15, 0
    %p110 = por %p108, %p109
    %p111 = scmp.le.s32.totalorder 1, %s9
    %p112 = scmp.lt.s32.totalorder %s9, 3
    %p113 = pnand %p111, %p112
    %p114 = pneg %p113
    // Predicated region
    $region9: #{_lambda_.1} parent=5 // pred_check
      _
    $region10: #{_lambda_.1} parent=5 // pred_check_branch
      %116 = sbr.rel (%p113) target = $region12
    $region11: #{_lambda_.1} parent=5 // pred_region
      %s117 = ssub.s32 %s9, 1
      // Predicated region
      $region13: #{_lambda_.1} parent=11 // pred_check
        %p118 = pneg %p56
      $region14: #{_lambda_.1} parent=11 // pred_check_branch
        %120 = sbr.rel (%p118) target = $region16
      $region15: #{_lambda_.1} parent=11 // pred_region
        _
      $region16: #{_lambda_.1} parent=11 // pred_fallthru
        _
      // Predicated region
      $region17: #{_lambda_.1} parent=11 // pred_check
        %p121 = pneg %p77
      $region18: #{_lambda_.1} parent=11 // pred_check_branch
        %123 = sbr.rel (%p121) target = $region20
      $region19: #{_lambda_.1} parent=11 // pred_region
        _
      $region20: #{_lambda_.1} parent=11 // pred_fallthru
        _
    $region12: #{_lambda_.1} parent=5 // pred_fallthru
      _
    %p124 = scmp.lt.s32.totalorder %s9, 2
    // Predicated region
    $region21: #{_lambda_.1} parent=5 // pred_check
      %p125 = pneg %p124
    $region22: #{_lambda_.1} parent=5 // pred_check_branch
      %127 = sbr.rel (%p125) target = $region24
    $region23: #{_lambda_.1} parent=5 // pred_region
      // Predicated region
      $region25: #{_lambda_.1} parent=23 // pred_check
        %p128 = pneg %p29
      $region26: #{_lambda_.1} parent=23 // pred_check_branch
        %130 = sbr.rel (%p128) target = $region28
      $region27: #{_lambda_.1} parent=23 // pred_region
        %p131 = scmp.lt.s32.totalorder %s9, 1
        %s132 = scalar_select %p131, %s9, 1
        %s133 = smul.addr %s132, 9
        %s134 = smul.addr %s133, 4
        %s135 = scalar_lea.vmem %s0, %s134
      $region28: #{_lambda_.1} parent=23 // pred_fallthru
        _
    $region24: #{_lambda_.1} parent=5 // pred_fallthru
      _
    %p136 = scmp.le.s32.totalorder 1, %s9
    %p137 = scmp.lt.s32.totalorder %s9, 3
    %p138 = pnand %p136, %p137
    %p139 = pneg %p138
    // Predicated region
    $region29: #{_lambda_.1} parent=5 // pred_check
      _
    $region30: #{_lambda_.1} parent=5 // pred_check_branch
      %141 = sbr.rel (%p138) target = $region32
    $region31: #{_lambda_.1} parent=5 // pred_region
      %s142 = ssub.s32 %s9, 1
      %p143 = scmp.lt.s32.totalorder %s14, 1
      %s144 = scalar_select %p143, %s14, 1
      %s145 = smul.addr %s144, 9
      %s146 = smul.addr %s145, 4
      %s147 = scalar_lea.vmem %s0, %s146
      %p148 = pneg %p35
      %p149 = pneg %p32
      %p150 = pneg %p56
      %p151 = pneg %p53
      %p152 = pneg %p77
      %p153 = pneg %p74
      %p154 = pneg %p103
      %p155 = pneg %p100
      %p156 = scmp.lt.s32.totalorder %s14, 1
      %s157 = scalar_select %p156, %s14, 1
      %s158 = smul.addr %s157, 8
      %s159 = smul.addr %s158, 8
      %s160 = scalar_lea.vmem %s3, %s159
      %p161 = scmp.lt.s32.totalorder %s14, 1
      %s162 = scalar_select %p161, %s14, 1
      %s163 = smul.addr %s162, 9
      %s164 = smul.addr %s163, 4
      %s165 = scalar_lea.vmem %s0, %s164
      %p166 = scmp.lt.s32.totalorder %s14, 1
      %s167 = scalar_select %p166, %s14, 1
      %s168 = smul.addr %s167, 8
      %s169 = smul.addr %s168, 8
      %s170 = scalar_lea.vmem %s3, %s169
      %v172 = vld [vmem:[%s165] sm:$0xff]
      %v173 = vld [vmem:[%s165 + $0x8] sm:$0xf]
      %v174 = vld [vmem:[%s165 + $0xc] sm:$0xff]
      %v175 = vld [vmem:[%s165 + $0x14] sm:$0xf]
      %v176 = vld [vmem:[%s165 + $0x18] sm:$0x11]
      %v177 = vld [vmem:[%s165 + $0x20] sm:$0x1]
      %v178 = vld [vmem:[%s1] sm:$0xff]
      %v179 = vld [vmem:[%s1 + $0x8] sm:$0xff]
      %v180 = vld [vmem:[%s1 + $0x10] sm:$0xff]
      %v181 = vld [vmem:[%s1 + $0x18] sm:$0xff]
      %v182 = vld [vmem:[%s1 + $0x20] sm:$0xff]
      %v183 = vld [vmem:[%s1 + $0x28] sm:$0xff]
      %v184 = vld [vmem:[%s1 + $0x30] sm:$0xff]
      %v185 = vld [vmem:[%s1 + $0x38] sm:$0xff]
      %v186 = vld [vmem:[%s1 + $0x40] sm:$0xff]
      %v187 = vld [vmem:[%s1 + $0x48] sm:$0xff]
      %v188 = vld [vmem:[%s1 + $0x50] sm:$0xff]
      %v189 = vld [vmem:[%s1 + $0x58] sm:$0xff]
      %v190 = vld [vmem:[%s1 + $0x60] sm:$0xff]
      %v191 = vld [vmem:[%s1 + $0x68] sm:$0xff]
      %v192 = vld [vmem:[%s1 + $0x70] sm:$0xff]
      %v193 = vld [vmem:[%s1 + $0x78] sm:$0xff]
      %v194 = vld [vmem:[%s1 + $0x80] sm:$0xff]
      %v195 = vld [vmem:[%s1 + $0x88] sm:$0xff]
      %v196 = vld [vmem:[%s1 + $0x90] sm:$0xff]
      %v197 = vld [vmem:[%s1 + $0x98] sm:$0xff]
      %v198 = vld [vmem:[%s1 + $0xa0] sm:$0xff]
      %v199 = vld [vmem:[%s1 + $0xa8] sm:$0xff]
      %v200 = vld [vmem:[%s1 + $0xb0] sm:$0xff]
      %v201 = vld [vmem:[%s1 + $0xb8] sm:$0xff]
      %v202 = vld [vmem:[%s1 + $0xc0] sm:$0xff]
      %v203 = vld [vmem:[%s1 + $0xc8] sm:$0xff]
      %v204 = vld [vmem:[%s1 + $0xd0] sm:$0xff]
      %v205 = vld [vmem:[%s1 + $0xd8] sm:$0xff]
      %v206 = vld [vmem:[%s1 + $0xe0] sm:$0xff]
      %v207 = vld [vmem:[%s1 + $0xe8] sm:$0xff]
      %v208 = vld [vmem:[%s1 + $0xf0] sm:$0xff]
      %v209 = vld [vmem:[%s1 + $0xf8] sm:$0xff]
      %v210 = vld [vmem:[%s1 + $0x100] sm:$0xff]
      %v211 = vld [vmem:[%s1 + $0x108] sm:$0xff]
      %v212 = vld [vmem:[%s1 + $0x110] sm:$0xff]
      %v213 = vld [vmem:[%s1 + $0x118] sm:$0xff]
      %v214 = vld [vmem:[%s1 + $0x120] sm:$0xff]
      %v215 = vld [vmem:[%s1 + $0x128] sm:$0xff]
      %v216 = vld [vmem:[%s1 + $0x130] sm:$0xff]
      %v217 = vld [vmem:[%s1 + $0x138] sm:$0xff]
      %v218 = vld [vmem:[%s1 + $0x140] sm:$0xff]
      %v219 = vld [vmem:[%s1 + $0x148] sm:$0xff]
      %v220 = vld [vmem:[%s1 + $0x150] sm:$0xff]
      %v221 = vld [vmem:[%s1 + $0x158] sm:$0xff]
      %v222 = vld [vmem:[%s1 + $0x160] sm:$0xff]
      %v223 = vld [vmem:[%s1 + $0x168] sm:$0xff]
      %v224 = vld [vmem:[%s1 + $0x170] sm:$0xff]
      %v225 = vld [vmem:[%s1 + $0x178] sm:$0xff]
      %v226 = vld [vmem:[%s1 + $0x180] sm:$0xff]
      %v227 = vld [vmem:[%s1 + $0x188] sm:$0xff]
      %v228 = vld [vmem:[%s1 + $0x190] sm:$0xff]
      %v229 = vld [vmem:[%s1 + $0x198] sm:$0xff]
      %v230 = vld [vmem:[%s1 + $0x1a0] sm:$0xff]
      %v231 = vld [vmem:[%s1 + $0x1a8] sm:$0xff]
      %v232 = vld [vmem:[%s1 + $0x1b0] sm:$0xff]
      %v233 = vld [vmem:[%s1 + $0x1b8] sm:$0xff]
      %v234 = vld [vmem:[%s1 + $0x1c0] sm:$0xff]
      %v235 = vld [vmem:[%s1 + $0x1c8] sm:$0xff]
      %v236 = vld [vmem:[%s1 + $0x1d0] sm:$0xff]
      %v237 = vld [vmem:[%s1 + $0x1d8] sm:$0xff]
      %v238 = vld [vmem:[%s1 + $0x1e0] sm:$0xff]
      %v239 = vld [vmem:[%s1 + $0x1e8] sm:$0xff]
      %v240 = vld [vmem:[%s1 + $0x1f0] sm:$0xff]
      %v241 = vld [vmem:[%s1 + $0x1f8] sm:$0xff]
      %v242 = vld [vmem:[%s1 + $0x200] sm:$0xff]
      %v243 = vld [vmem:[%s1 + $0x208] sm:$0xff]
      %v244 = vld [vmem:[%s1 + $0x210] sm:$0xff]
      %v245 = vld [vmem:[%s1 + $0x218] sm:$0xff]
      %v246 = vld [vmem:[%s1 + $0x220] sm:$0xff]
      %v247 = vld [vmem:[%s1 + $0x228] sm:$0xff]
      %v248 = vld [vmem:[%s1 + $0x230] sm:$0xff]
      %v249 = vld [vmem:[%s1 + $0x238] sm:$0xff]
      %s250 = scalar_lea.vmem %s1, 576
      %v251 = vld [vmem:[%s250] sm:$0xff]
      %v252 = vld [vmem:[%s250 + $0x8] sm:$0xff]
      %v253 = vld [vmem:[%s250 + $0x10] sm:$0xff]
      %v254 = vld [vmem:[%s250 + $0x18] sm:$0xff]
      %v255 = vld [vmem:[%s250 + $0x20] sm:$0xff]
      %v256 = vld [vmem:[%s250 + $0x28] sm:$0xff]
      %v257 = vld [vmem:[%s250 + $0x30] sm:$0xff]
      %v258 = vld [vmem:[%s250 + $0x38] sm:$0xff]
      %v259 = vld [vmem:[%s250 + $0x40] sm:$0xff]
      %v260 = vld [vmem:[%s250 + $0x48] sm:$0xff]
      %v261 = vld [vmem:[%s250 + $0x50] sm:$0xff]
      %v262 = vld [vmem:[%s250 + $0x58] sm:$0xff]
      %v263 = vld [vmem:[%s250 + $0x60] sm:$0xff]
      %v264 = vld [vmem:[%s250 + $0x68] sm:$0xff]
      %v265 = vld [vmem:[%s250 + $0x70] sm:$0xff]
      %v266 = vld [vmem:[%s250 + $0x78] sm:$0xff]
      %v267 = vld [vmem:[%s250 + $0x80] sm:$0xff]
      %v268 = vld [vmem:[%s250 + $0x88] sm:$0xff]
      %v269 = vld [vmem:[%s250 + $0x90] sm:$0xff]
      %v270 = vld [vmem:[%s250 + $0x98] sm:$0xff]
      %v271 = vld [vmem:[%s250 + $0xa0] sm:$0xff]
      %v272 = vld [vmem:[%s250 + $0xa8] sm:$0xff]
      %v273 = vld [vmem:[%s250 + $0xb0] sm:$0xff]
      %v274 = vld [vmem:[%s250 + $0xb8] sm:$0xff]
      %v275 = vld [vmem:[%s250 + $0xc0] sm:$0xff]
      %v276 = vld [vmem:[%s250 + $0xc8] sm:$0xff]
      %v277 = vld [vmem:[%s250 + $0xd0] sm:$0xff]
      %v278 = vld [vmem:[%s250 + $0xd8] sm:$0xff]
      %v279 = vld [vmem:[%s250 + $0xe0] sm:$0xff]
      %v280 = vld [vmem:[%s250 + $0xe8] sm:$0xff]
      %v281 = vld [vmem:[%s250 + $0xf0] sm:$0xff]
      %v282 = vld [vmem:[%s250 + $0xf8] sm:$0xff]
      %v283 = vld [vmem:[%s250 + $0x100] sm:$0xff]
      %v284 = vld [vmem:[%s250 + $0x108] sm:$0xff]
      %v285 = vld [vmem:[%s250 + $0x110] sm:$0xff]
      %v286 = vld [vmem:[%s250 + $0x118] sm:$0xff]
      %v287 = vld [vmem:[%s250 + $0x120] sm:$0xff]
      %v288 = vld [vmem:[%s250 + $0x128] sm:$0xff]
      %v289 = vld [vmem:[%s250 + $0x130] sm:$0xff]
      %v290 = vld [vmem:[%s250 + $0x138] sm:$0xff]
      %v291 = vld [vmem:[%s250 + $0x140] sm:$0xff]
      %v292 = vld [vmem:[%s250 + $0x148] sm:$0xff]
      %v293 = vld [vmem:[%s250 + $0x150] sm:$0xff]
      %v294 = vld [vmem:[%s250 + $0x158] sm:$0xff]
      %v295 = vld [vmem:[%s250 + $0x160] sm:$0xff]
      %v296 = vld [vmem:[%s250 + $0x168] sm:$0xff]
      %v297 = vld [vmem:[%s250 + $0x170] sm:$0xff]
      %v298 = vld [vmem:[%s250 + $0x178] sm:$0xff]
      %v299 = vld [vmem:[%s250 + $0x180] sm:$0xff]
      %v300 = vld [vmem:[%s250 + $0x188] sm:$0xff]
      %v301 = vld [vmem:[%s250 + $0x190] sm:$0xff]
      %v302 = vld [vmem:[%s250 + $0x198] sm:$0xff]
      %v303 = vld [vmem:[%s250 + $0x1a0] sm:$0xff]
      %v304 = vld [vmem:[%s250 + $0x1a8] sm:$0xff]
      %v305 = vld [vmem:[%s250 + $0x1b0] sm:$0xff]
      %v306 = vld [vmem:[%s250 + $0x1b8] sm:$0xff]
      %v307 = vld [vmem:[%s250 + $0x1c0] sm:$0xff]
      %v308 = vld [vmem:[%s250 + $0x1c8] sm:$0xff]
      %v309 = vld [vmem:[%s250 + $0x1d0] sm:$0xff]
      %v310 = vld [vmem:[%s250 + $0x1d8] sm:$0xff]
      %v311 = vld [vmem:[%s250 + $0x1e0] sm:$0xff]
      %v312 = vld [vmem:[%s250 + $0x1e8] sm:$0xff]
      %v313 = vld [vmem:[%s250 + $0x1f0] sm:$0xff]
      %v314 = vld [vmem:[%s250 + $0x1f8] sm:$0xff]
      %v315 = vld [vmem:[%s250 + $0x200] sm:$0xff]
      %v316 = vld [vmem:[%s250 + $0x208] sm:$0xff]
      %v317 = vld [vmem:[%s250 + $0x210] sm:$0xff]
      %v318 = vld [vmem:[%s250 + $0x218] sm:$0xff]
      %v319 = vld [vmem:[%s250 + $0x220] sm:$0xff]
      %v320 = vld [vmem:[%s250 + $0x228] sm:$0xff]
      %v321 = vld [vmem:[%s250 + $0x230] sm:$0xff]
      %v322 = vld [vmem:[%s250 + $0x238] sm:$0xff]
      %v329 = vunpack.c.l.b16 %v172
      %v330 = vunpack.c.h.b16 %v172
      %v331 = vunpack.c.l.b16 %v173
      %v332 = vunpack.c.l.b16 %v174
      %v333 = vunpack.c.h.b16 %v174
      %v334 = vunpack.c.l.b16 %v175
      %v335 = vunpack.c.l.b16 %v176
      %v336 = vunpack.c.h.b16 %v176
      %v337 = vunpack.c.l.b16 %v177
      %v338 = vpack.c.b16 %v332, %v329
      %v339 = vpack.c.b16 %v333, %v330
      %v340 = vpack.c.b16 %v334, %v331
      %v341 = vpack.c.b16 %v335, %v335
      %v342 = vpack.c.b16 %v336, %v336
      %v343 = vpack.c.b16 %v337, %v337
      %vm344 = vsmask.f32 7424
      %v346 = vshrl.u32 %v338, 16
      %v348 = vshll.u32 %v338, 16
      %v350 = vrot.slane %v348, 1
      %v351 = vor.u32 %v346, %v350
      %v353 = vshll.u32 %v341, 16
      %v355 = vrot.slane %v353, 1
      %v356 = vsel %vm344, %v351, %v355
      %v358 = vshrl.u32 %v339, 16
      %v360 = vshll.u32 %v339, 16
      %v362 = vrot.slane %v360, 1
      %v363 = vor.u32 %v358, %v362
      %v365 = vshll.u32 %v342, 16
      %v367 = vrot.slane %v365, 1
      %v368 = vsel %vm344, %v363, %v367
      %v370 = vshrl.u32 %v340, 16
      %v372 = vshll.u32 %v340, 16
      %v374 = vrot.slane %v372, 1
      %v375 = vor.u32 %v370, %v374
      %v377 = vshll.u32 %v343, 16
      %v379 = vrot.slane %v377, 1
      %v380 = vsel %vm344, %v375, %v379
      %v455 = vunpack.c.l.b16 %v251
      %v456 = vunpack.c.h.b16 %v251
      %v457 = vunpack.c.l.b16 %v252
      %v458 = vunpack.c.h.b16 %v252
      %v459 = vunpack.c.l.b16 %v253
      %v460 = vunpack.c.h.b16 %v253
      %v461 = vunpack.c.l.b16 %v254
      %v462 = vunpack.c.h.b16 %v254
      %v463 = vunpack.c.l.b16 %v255
      %v464 = vunpack.c.h.b16 %v255
      %v465 = vunpack.c.l.b16 %v256
      %v466 = vunpack.c.h.b16 %v256
      %v467 = vunpack.c.l.b16 %v257
      %v468 = vunpack.c.h.b16 %v257
      %v469 = vunpack.c.l.b16 %v258
      %v470 = vunpack.c.h.b16 %v258
      %v471 = vunpack.c.l.b16 %v259
      %v472 = vunpack.c.h.b16 %v259
      %v473 = vunpack.c.l.b16 %v260
      %v474 = vunpack.c.h.b16 %v260
      %v475 = vunpack.c.l.b16 %v261
      %v476 = vunpack.c.h.b16 %v261
      %v477 = vunpack.c.l.b16 %v262
      %v478 = vunpack.c.h.b16 %v262
      %v479 = vunpack.c.l.b16 %v263
      %v480 = vunpack.c.h.b16 %v263
      %v481 = vunpack.c.l.b16 %v264
      %v482 = vunpack.c.h.b16 %v264
      %v483 = vunpack.c.l.b16 %v265
      %v484 = vunpack.c.h.b16 %v265
      %v485 = vunpack.c.l.b16 %v266
      %v486 = vunpack.c.h.b16 %v266
      %v487 = vunpack.c.l.b16 %v267
      %v488 = vunpack.c.h.b16 %v267
      %v489 = vunpack.c.l.b16 %v268
      %v490 = vunpack.c.h.b16 %v268
      %v491 = vunpack.c.l.b16 %v269
      %v492 = vunpack.c.h.b16 %v269
      %v493 = vunpack.c.l.b16 %v270
      %v494 = vunpack.c.h.b16 %v270
      %v495 = vunpack.c.l.b16 %v271
      %v496 = vunpack.c.h.b16 %v271
      %v497 = vunpack.c.l.b16 %v272
      %v498 = vunpack.c.h.b16 %v272
      %v499 = vunpack.c.l.b16 %v273
      %v500 = vunpack.c.h.b16 %v273
      %v501 = vunpack.c.l.b16 %v274
      %v502 = vunpack.c.h.b16 %v274
      %v503 = vunpack.c.l.b16 %v275
      %v504 = vunpack.c.h.b16 %v275
      %v505 = vunpack.c.l.b16 %v276
      %v506 = vunpack.c.h.b16 %v276
      %v507 = vunpack.c.l.b16 %v277
      %v508 = vunpack.c.h.b16 %v277
      %v509 = vunpack.c.l.b16 %v278
      %v510 = vunpack.c.h.b16 %v278
      %v511 = vunpack.c.l.b16 %v279
      %v512 = vunpack.c.h.b16 %v279
      %v513 = vunpack.c.l.b16 %v280
      %v514 = vunpack.c.h.b16 %v280
      %v515 = vunpack.c.l.b16 %v281
      %v516 = vunpack.c.h.b16 %v281
      %v517 = vunpack.c.l.b16 %v282
      %v518 = vunpack.c.h.b16 %v282
      %v519 = vunpack.c.l.b16 %v283
      %v520 = vunpack.c.h.b16 %v283
      %v521 = vunpack.c.l.b16 %v284
      %v522 = vunpack.c.h.b16 %v284
      %v523 = vunpack.c.l.b16 %v285
      %v524 = vunpack.c.h.b16 %v285
      %v525 = vunpack.c.l.b16 %v286
      %v526 = vunpack.c.h.b16 %v286
      %v527 = vunpack.c.l.b16 %v287
      %v528 = vunpack.c.h.b16 %v287
      %v529 = vunpack.c.l.b16 %v288
      %v530 = vunpack.c.h.b16 %v288
      %v531 = vunpack.c.l.b16 %v289
      %v532 = vunpack.c.h.b16 %v289
      %v533 = vunpack.c.l.b16 %v290
      %v534 = vunpack.c.h.b16 %v290
      %v535 = vunpack.c.l.b16 %v291
      %v536 = vunpack.c.h.b16 %v291
      %v537 = vunpack.c.l.b16 %v292
      %v538 = vunpack.c.h.b16 %v292
      %v539 = vunpack.c.l.b16 %v293
      %v540 = vunpack.c.h.b16 %v293
      %v541 = vunpack.c.l.b16 %v294
      %v542 = vunpack.c.h.b16 %v294
      %v543 = vunpack.c.l.b16 %v295
      %v544 = vunpack.c.h.b16 %v295
      %v545 = vunpack.c.l.b16 %v296
      %v546 = vunpack.c.h.b16 %v296
      %v547 = vunpack.c.l.b16 %v297
      %v548 = vunpack.c.h.b16 %v297
      %v549 = vunpack.c.l.b16 %v298
      %v550 = vunpack.c.h.b16 %v298
      %v551 = vunpack.c.l.b16 %v299
      %v552 = vunpack.c.h.b16 %v299
      %v553 = vunpack.c.l.b16 %v300
      %v554 = vunpack.c.h.b16 %v300
      %v555 = vunpack.c.l.b16 %v301
      %v556 = vunpack.c.h.b16 %v301
      %v557 = vunpack.c.l.b16 %v302
      %v558 = vunpack.c.h.b16 %v302
      %v559 = vunpack.c.l.b16 %v303
      %v560 = vunpack.c.h.b16 %v303
      %v561 = vunpack.c.l.b16 %v304
      %v562 = vunpack.c.h.b16 %v304
      %v563 = vunpack.c.l.b16 %v305
      %v564 = vunpack.c.h.b16 %v305
      %v565 = vunpack.c.l.b16 %v306
      %v566 = vunpack.c.h.b16 %v306
      %v567 = vunpack.c.l.b16 %v307
      %v568 = vunpack.c.h.b16 %v307
      %v569 = vunpack.c.l.b16 %v308
      %v570 = vunpack.c.h.b16 %v308
      %v571 = vunpack.c.l.b16 %v309
      %v572 = vunpack.c.h.b16 %v309
      %v573 = vunpack.c.l.b16 %v310
      %v574 = vunpack.c.h.b16 %v310
      %v575 = vunpack.c.l.b16 %v311
      %v576 = vunpack.c.h.b16 %v311
      %v577 = vunpack.c.l.b16 %v312
      %v578 = vunpack.c.h.b16 %v312
      %v579 = vunpack.c.l.b16 %v313
      %v580 = vunpack.c.h.b16 %v313
      %v581 = vunpack.c.l.b16 %v314
      %v582 = vunpack.c.h.b16 %v314
      %v583 = vunpack.c.l.b16 %v315
      %v584 = vunpack.c.h.b16 %v315
      %v585 = vunpack.c.l.b16 %v316
      %v586 = vunpack.c.h.b16 %v316
      %v587 = vunpack.c.l.b16 %v317
      %v588 = vunpack.c.h.b16 %v317
      %v589 = vunpack.c.l.b16 %v318
      %v590 = vunpack.c.h.b16 %v318
      %v591 = vunpack.c.l.b16 %v319
      %v592 = vunpack.c.h.b16 %v319
      %v593 = vunpack.c.l.b16 %v320
      %v594 = vunpack.c.h.b16 %v320
      %v595 = vunpack.c.l.b16 %v321
      %v596 = vunpack.c.h.b16 %v321
      %v597 = vunpack.c.l.b16 %v322
      %v598 = vunpack.c.h.b16 %v322
      %v599 = vpack.c.b16 %v459, %v455
      %v600 = vpack.c.b16 %v460, %v456
      %v601 = vpack.c.b16 %v461, %v457
      %v602 = vpack.c.b16 %v462, %v458
      %v603 = vpack.c.b16 %v467, %v463
      %v604 = vpack.c.b16 %v468, %v464
      %v605 = vpack.c.b16 %v469, %v465
      %v606 = vpack.c.b16 %v470, %v466
      %v607 = vpack.c.b16 %v475, %v471
      %v608 = vpack.c.b16 %v476, %v472
      %v609 = vpack.c.b16 %v477, %v473
      %v610 = vpack.c.b16 %v478, %v474
      %v611 = vpack.c.b16 %v483, %v479
      %v612 = vpack.c.b16 %v484, %v480
      %v613 = vpack.c.b16 %v485, %v481
      %v614 = vpack.c.b16 %v486, %v482
      %v615 = vpack.c.b16 %v491, %v487
      %v616 = vpack.c.b16 %v492, %v488
      %v617 = vpack.c.b16 %v493, %v489
      %v618 = vpack.c.b16 %v494, %v490
      %v619 = vpack.c.b16 %v499, %v495
      %v620 = vpack.c.b16 %v500, %v496
      %v621 = vpack.c.b16 %v501, %v497
      %v622 = vpack.c.b16 %v502, %v498
      %v623 = vpack.c.b16 %v507, %v503
      %v624 = vpack.c.b16 %v508, %v504
      %v625 = vpack.c.b16 %v509, %v505
      %v626 = vpack.c.b16 %v510, %v506
      %v627 = vpack.c.b16 %v515, %v511
      %v628 = vpack.c.b16 %v516, %v512
      %v629 = vpack.c.b16 %v517, %v513
      %v630 = vpack.c.b16 %v518, %v514
      %v631 = vpack.c.b16 %v523, %v519
      %v632 = vpack.c.b16 %v524, %v520
      %v633 = vpack.c.b16 %v525, %v521
      %v634 = vpack.c.b16 %v526, %v522
      %v635 = vpack.c.b16 %v531, %v527
      %v636 = vpack.c.b16 %v532, %v528
      %v637 = vpack.c.b16 %v533, %v529
      %v638 = vpack.c.b16 %v534, %v530
      %v639 = vpack.c.b16 %v539, %v535
      %v640 = vpack.c.b16 %v540, %v536
      %v641 = vpack.c.b16 %v541, %v537
      %v642 = vpack.c.b16 %v542, %v538
      %v643 = vpack.c.b16 %v547, %v543
      %v644 = vpack.c.b16 %v548, %v544
      %v645 = vpack.c.b16 %v549, %v545
      %v646 = vpack.c.b16 %v550, %v546
      %v647 = vpack.c.b16 %v555, %v551
      %v648 = vpack.c.b16 %v556, %v552
      %v649 = vpack.c.b16 %v557, %v553
      %v650 = vpack.c.b16 %v558, %v554
      %v651 = vpack.c.b16 %v563, %v559
      %v652 = vpack.c.b16 %v564, %v560
      %v653 = vpack.c.b16 %v565, %v561
      %v654 = vpack.c.b16 %v566, %v562
      %v655 = vpack.c.b16 %v571, %v567
      %v656 = vpack.c.b16 %v572, %v568
      %v657 = vpack.c.b16 %v573, %v569
      %v658 = vpack.c.b16 %v574, %v570
      %v659 = vpack.c.b16 %v579, %v575
      %v660 = vpack.c.b16 %v580, %v576
      %v661 = vpack.c.b16 %v581, %v577
      %v662 = vpack.c.b16 %v582, %v578
      %v663 = vpack.c.b16 %v587, %v583
      %v664 = vpack.c.b16 %v588, %v584
      %v665 = vpack.c.b16 %v589, %v585
      %v666 = vpack.c.b16 %v590, %v586
      %v667 = vpack.c.b16 %v595, %v591
      %v668 = vpack.c.b16 %v596, %v592
      %v669 = vpack.c.b16 %v597, %v593
      %v670 = vpack.c.b16 %v598, %v594
      %vm743 = vcmask 261120
      %v745 = vsel %vm743, %v380, 0
      %747 = vmatpush.bf16.msra.mxu0 %v627
      %748 = vmatpush.bf16.msra.mxu0 %v623
      %749 = vmatpush.bf16.msra.mxu0 %v619
      %750 = vmatpush.bf16.msra.mxu0 %v615
      %751 = vmatpush.bf16.msra.mxu0 %v611
      %752 = vmatpush.bf16.msra.mxu0 %v607
      %753 = vmatpush.bf16.msra.mxu0 %v603
      %754 = vmatpush.bf16.msra.mxu0 %v599
      %755 = vmatmul.bf16.gmra.mxu0 %v356
      %v756 = vpop.f32.mrf.mxu0
      %v757 = vadd.f32 0.0, %v756
      %v758 = vpop.f32.mrf.mxu0
      %v759 = vadd.f32 0.0, %v758
      %760 = vdwg.mxu0
      %761 = vmatpush.bf16.msra.mxu0 %v659
      %762 = vmatpush.bf16.msra.mxu0 %v655
      %763 = vmatpush.bf16.msra.mxu0 %v651
      %764 = vmatpush.bf16.msra.mxu0 %v647
      %765 = vmatpush.bf16.msra.mxu0 %v643
      %766 = vmatpush.bf16.msra.mxu0 %v639
      %767 = vmatpush.bf16.msra.mxu0 %v635
      %768 = vmatpush.bf16.msra.mxu0 %v631
      %769 = vmatmul.bf16.gmra.mxu0 %v368
      %v770 = vpop.f32.mrf.mxu0
      %v771 = vadd.f32 %v757, %v770
      %v772 = vpop.f32.mrf.mxu0
      %v773 = vadd.f32 %v759, %v772
      %774 = vdwg.mxu0
      %775 = vmatpush.bf16.msra.mxu0 0
      %776 = vmatpush.bf16.msra.mxu0 0
      %777 = vmatpush.bf16.msra.mxu0 0
      %778 = vmatpush.bf16.msra.mxu0 0
      %779 = vmatpush.bf16.msra.mxu0 0
      %780 = vmatpush.bf16.msra.mxu0 0
      %781 = vmatpush.bf16.msra.mxu0 %v667
      %782 = vmatpush.bf16.msra.mxu0 %v663
      %783 = vmatmul.bf16.gmra.mxu0 %v745
      %v784 = vpop.f32.mrf.mxu0
      %v785 = vadd.f32 %v771, %v784
      %v786 = vpop.f32.mrf.mxu0
      %v787 = vadd.f32 %v773, %v786
      %788 = vdwg.mxu0
      %789 = vmatpush.bf16.msra.mxu0 %v628
      %790 = vmatpush.bf16.msra.mxu0 %v624
      %791 = vmatpush.bf16.msra.mxu0 %v620
      %792 = vmatpush.bf16.msra.mxu0 %v616
      %793 = vmatpush.bf16.msra.mxu0 %v612
      %794 = vmatpush.bf16.msra.mxu0 %v608
      %795 = vmatpush.bf16.msra.mxu0 %v604
      %796 = vmatpush.bf16.msra.mxu0 %v600
      %797 = vmatmul.bf16.gmra.mxu0 %v356
      %v798 = vpop.f32.mrf.mxu0
      %v799 = vadd.f32 0.0, %v798
      %v800 = vpop.f32.mrf.mxu0
      %v801 = vadd.f32 0.0, %v800
      %802 = vdwg.mxu0
      %803 = vmatpush.bf16.msra.mxu0 %v660
      %804 = vmatpush.bf16.msra.mxu0 %v656
      %805 = vmatpush.bf16.msra.mxu0 %v652
      %806 = vmatpush.bf16.msra.mxu0 %v648
      %807 = vmatpush.bf16.msra.mxu0 %v644
      %808 = vmatpush.bf16.msra.mxu0 %v640
      %809 = vmatpush.bf16.msra.mxu0 %v636
      %810 = vmatpush.bf16.msra.mxu0 %v632
      %811 = vmatmul.bf16.gmra.mxu0 %v368
      %v812 = vpop.f32.mrf.mxu0
      %v813 = vadd.f32 %v799, %v812
      %v814 = vpop.f32.mrf.mxu0
      %v815 = vadd.f32 %v801, %v814
      %816 = vdwg.mxu0
      %817 = vmatpush.bf16.msra.mxu0 0
      %818 = vmatpush.bf16.msra.mxu0 0
      %819 = vmatpush.bf16.msra.mxu0 0
      %820 = vmatpush.bf16.msra.mxu0 0
      %821 = vmatpush.bf16.msra.mxu0 0
      %822 = vmatpush.bf16.msra.mxu0 0
      %823 = vmatpush.bf16.msra.mxu0 %v668
      %824 = vmatpush.bf16.msra.mxu0 %v664
      %825 = vmatmul.bf16.gmra.mxu0 %v745
      %v826 = vpop.f32.mrf.mxu0
      %v827 = vadd.f32 %v813, %v826
      %v828 = vpop.f32.mrf.mxu0
      %v829 = vadd.f32 %v815, %v828
      %830 = vdwg.mxu0
      %831 = vmatpush.bf16.msra.mxu0 %v629
      %832 = vmatpush.bf16.msra.mxu0 %v625
      %833 = vmatpush.bf16.msra.mxu0 %v621
      %834 = vmatpush.bf16.msra.mxu0 %v617
      %835 = vmatpush.bf16.msra.mxu0 %v613
      %836 = vmatpush.bf16.msra.mxu0 %v609
      %837 = vmatpush.bf16.msra.mxu0 %v605
      %838 = vmatpush.bf16.msra.mxu0 %v601
      %839 = vmatmul.bf16.gmra.mxu0 %v356
      %v840 = vpop.f32.mrf.mxu0
      %v841 = vadd.f32 0.0, %v840
      %v842 = vpop.f32.mrf.mxu0
      %v843 = vadd.f32 0.0, %v842
      %844 = vdwg.mxu0
      %845 = vmatpush.bf16.msra.mxu0 %v661
      %846 = vmatpush.bf16.msra.mxu0 %v657
      %847 = vmatpush.bf16.msra.mxu0 %v653
      %848 = vmatpush.bf16.msra.mxu0 %v649
      %849 = vmatpush.bf16.msra.mxu0 %v645
      %850 = vmatpush.bf16.msra.mxu0 %v641
      %851 = vmatpush.bf16.msra.mxu0 %v637
      %852 = vmatpush.bf16.msra.mxu0 %v633
      %853 = vmatmul.bf16.gmra.mxu0 %v368
      %v854 = vpop.f32.mrf.mxu0
      %v855 = vadd.f32 %v841, %v854
      %v856 = vpop.f32.mrf.mxu0
      %v857 = vadd.f32 %v843, %v856
      %858 = vdwg.mxu0
      %859 = vmatpush.bf16.msra.mxu0 0
      %860 = vmatpush.bf16.msra.mxu0 0
      %861 = vmatpush.bf16.msra.mxu0 0
      %862 = vmatpush.bf16.msra.mxu0 0
      %863 = vmatpush.bf16.msra.mxu0 0
      %864 = vmatpush.bf16.msra.mxu0 0
      %865 = vmatpush.bf16.msra.mxu0 %v669
      %866 = vmatpush.bf16.msra.mxu0 %v665
      %867 = vmatmul.bf16.gmra.mxu0 %v745
      %v868 = vpop.f32.mrf.mxu0
      %v869 = vadd.f32 %v855, %v868
      %v870 = vpop.f32.mrf.mxu0
      %v871 = vadd.f32 %v857, %v870
      %872 = vdwg.mxu0
      %873 = vmatpush.bf16.msra.mxu0 %v630
      %874 = vmatpush.bf16.msra.mxu0 %v626
      %875 = vmatpush.bf16.msra.mxu0 %v622
      %876 = vmatpush.bf16.msra.mxu0 %v618
      %877 = vmatpush.bf16.msra.mxu0 %v614
      %878 = vmatpush.bf16.msra.mxu0 %v610
      %879 = vmatpush.bf16.msra.mxu0 %v606
      %880 = vmatpush.bf16.msra.mxu0 %v602
      %881 = vmatmul.bf16.gmra.mxu0 %v356
      %v882 = vpop.f32.mrf.mxu0
      %v883 = vadd.f32 0.0, %v882
      %v884 = vpop.f32.mrf.mxu0
      %v885 = vadd.f32 0.0, %v884
      %886 = vdwg.mxu0
      %887 = vmatpush.bf16.msra.mxu0 %v662
      %888 = vmatpush.bf16.msra.mxu0 %v658
      %889 = vmatpush.bf16.msra.mxu0 %v654
      %890 = vmatpush.bf16.msra.mxu0 %v650
      %891 = vmatpush.bf16.msra.mxu0 %v646
      %892 = vmatpush.bf16.msra.mxu0 %v642
      %893 = vmatpush.bf16.msra.mxu0 %v638
      %894 = vmatpush.bf16.msra.mxu0 %v634
      %895 = vmatmul.bf16.gmra.mxu0 %v368
      %v896 = vpop.f32.mrf.mxu0
      %v897 = vadd.f32 %v883, %v896
      %v898 = vpop.f32.mrf.mxu0
      %v899 = vadd.f32 %v885, %v898
      %900 = vdwg.mxu0
      %901 = vmatpush.bf16.msra.mxu0 0
      %902 = vmatpush.bf16.msra.mxu0 0
      %903 = vmatpush.bf16.msra.mxu0 0
      %904 = vmatpush.bf16.msra.mxu0 0
      %905 = vmatpush.bf16.msra.mxu0 0
      %906 = vmatpush.bf16.msra.mxu0 0
      %907 = vmatpush.bf16.msra.mxu0 %v670
      %908 = vmatpush.bf16.msra.mxu0 %v666
      %909 = vmatmul.bf16.gmra.mxu0 %v745
      %v910 = vpop.f32.mrf.mxu0
      %v911 = vadd.f32 %v897, %v910
      %v912 = vpop.f32.mrf.mxu0
      %v913 = vadd.f32 %v899, %v912
      %914 = vdwg.mxu0
      %v989 = vunpack.c.l.b16 %v178
      %v990 = vunpack.c.h.b16 %v178
      %v991 = vunpack.c.l.b16 %v179
      %v992 = vunpack.c.h.b16 %v179
      %v993 = vunpack.c.l.b16 %v180
      %v994 = vunpack.c.h.b16 %v180
      %v995 = vunpack.c.l.b16 %v181
      %v996 = vunpack.c.h.b16 %v181
      %v997 = vunpack.c.l.b16 %v182
      %v998 = vunpack.c.h.b16 %v182
      %v999 = vunpack.c.l.b16 %v183
      %v1000 = vunpack.c.h.b16 %v183
      %v1001 = vunpack.c.l.b16 %v184
      %v1002 = vunpack.c.h.b16 %v184
      %v1003 = vunpack.c.l.b16 %v185
      %v1004 = vunpack.c.h.b16 %v185
      %v1005 = vunpack.c.l.b16 %v186
      %v1006 = vunpack.c.h.b16 %v186
      %v1007 = vunpack.c.l.b16 %v187
      %v1008 = vunpack.c.h.b16 %v187
      %v1009 = vunpack.c.l.b16 %v188
      %v1010 = vunpack.c.h.b16 %v188
      %v1011 = vunpack.c.l.b16 %v189
      %v1012 = vunpack.c.h.b16 %v189
      %v1013 = vunpack.c.l.b16 %v190
      %v1014 = vunpack.c.h.b16 %v190
      %v1015 = vunpack.c.l.b16 %v191
      %v1016 = vunpack.c.h.b16 %v191
      %v1017 = vunpack.c.l.b16 %v192
      %v1018 = vunpack.c.h.b16 %v192
      %v1019 = vunpack.c.l.b16 %v193
      %v1020 = vunpack.c.h.b16 %v193
      %v1021 = vunpack.c.l.b16 %v194
      %v1022 = vunpack.c.h.b16 %v194
      %v1023 = vunpack.c.l.b16 %v195
      %v1024 = vunpack.c.h.b16 %v195
      %v1025 = vunpack.c.l.b16 %v196
      %v1026 = vunpack.c.h.b16 %v196
      %v1027 = vunpack.c.l.b16 %v197
      %v1028 = vunpack.c.h.b16 %v197
      %v1029 = vunpack.c.l.b16 %v198
      %v1030 = vunpack.c.h.b16 %v198
      %v1031 = vunpack.c.l.b16 %v199
      %v1032 = vunpack.c.h.b16 %v199
      %v1033 = vunpack.c.l.b16 %v200
      %v1034 = vunpack.c.h.b16 %v200
      %v1035 = vunpack.c.l.b16 %v201
      %v1036 = vunpack.c.h.b16 %v201
      %v1037 = vunpack.c.l.b16 %v202
      %v1038 = vunpack.c.h.b16 %v202
      %v1039 = vunpack.c.l.b16 %v203
      %v1040 = vunpack.c.h.b16 %v203
      %v1041 = vunpack.c.l.b16 %v204
      %v1042 = vunpack.c.h.b16 %v204
      %v1043 = vunpack.c.l.b16 %v205
      %v1044 = vunpack.c.h.b16 %v205
      %v1045 = vunpack.c.l.b16 %v206
      %v1046 = vunpack.c.h.b16 %v206
      %v1047 = vunpack.c.l.b16 %v207
      %v1048 = vunpack.c.h.b16 %v207
      %v1049 = vunpack.c.l.b16 %v208
      %v1050 = vunpack.c.h.b16 %v208
      %v1051 = vunpack.c.l.b16 %v209
      %v1052 = vunpack.c.h.b16 %v209
      %v1053 = vunpack.c.l.b16 %v210
      %v1054 = vunpack.c.h.b16 %v210
      %v1055 = vunpack.c.l.b16 %v211
      %v1056 = vunpack.c.h.b16 %v211
      %v1057 = vunpack.c.l.b16 %v212
      %v1058 = vunpack.c.h.b16 %v212
      %v1059 = vunpack.c.l.b16 %v213
      %v1060 = vunpack.c.h.b16 %v213
      %v1061 = vunpack.c.l.b16 %v214
      %v1062 = vunpack.c.h.b16 %v214
      %v1063 = vunpack.c.l.b16 %v215
      %v1064 = vunpack.c.h.b16 %v215
      %v1065 = vunpack.c.l.b16 %v216
      %v1066 = vunpack.c.h.b16 %v216
      %v1067 = vunpack.c.l.b16 %v217
      %v1068 = vunpack.c.h.b16 %v217
      %v1069 = vunpack.c.l.b16 %v218
      %v1070 = vunpack.c.h.b16 %v218
      %v1071 = vunpack.c.l.b16 %v219
      %v1072 = vunpack.c.h.b16 %v219
      %v1073 = vunpack.c.l.b16 %v220
      %v1074 = vunpack.c.h.b16 %v220
      %v1075 = vunpack.c.l.b16 %v221
      %v1076 = vunpack.c.h.b16 %v221
      %v1077 = vunpack.c.l.b16 %v222
      %v1078 = vunpack.c.h.b16 %v222
      %v1079 = vunpack.c.l.b16 %v223
      %v1080 = vunpack.c.h.b16 %v223
      %v1081 = vunpack.c.l.b16 %v224
      %v1082 = vunpack.c.h.b16 %v224
      %v1083 = vunpack.c.l.b16 %v225
      %v1084 = vunpack.c.h.b16 %v225
      %v1085 = vunpack.c.l.b16 %v226
      %v1086 = vunpack.c.h.b16 %v226
      %v1087 = vunpack.c.l.b16 %v227
      %v1088 = vunpack.c.h.b16 %v227
      %v1089 = vunpack.c.l.b16 %v228
      %v1090 = vunpack.c.h.b16 %v228
      %v1091 = vunpack.c.l.b16 %v229
      %v1092 = vunpack.c.h.b16 %v229
      %v1093 = vunpack.c.l.b16 %v230
      %v1094 = vunpack.c.h.b16 %v230
      %v1095 = vunpack.c.l.b16 %v231
      %v1096 = vunpack.c.h.b16 %v231
      %v1097 = vunpack.c.l.b16 %v232
      %v1098 = vunpack.c.h.b16 %v232
      %v1099 = vunpack.c.l.b16 %v233
      %v1100 = vunpack.c.h.b16 %v233
      %v1101 = vunpack.c.l.b16 %v234
      %v1102 = vunpack.c.h.b16 %v234
      %v1103 = vunpack.c.l.b16 %v235
      %v1104 = vunpack.c.h.b16 %v235
      %v1105 = vunpack.c.l.b16 %v236
      %v1106 = vunpack.c.h.b16 %v236
      %v1107 = vunpack.c.l.b16 %v237
      %v1108 = vunpack.c.h.b16 %v237
      %v1109 = vunpack.c.l.b16 %v238
      %v1110 = vunpack.c.h.b16 %v238
      %v1111 = vunpack.c.l.b16 %v239
      %v1112 = vunpack.c.h.b16 %v239
      %v1113 = vunpack.c.l.b16 %v240
      %v1114 = vunpack.c.h.b16 %v240
      %v1115 = vunpack.c.l.b16 %v241
      %v1116 = vunpack.c.h.b16 %v241
      %v1117 = vunpack.c.l.b16 %v242
      %v1118 = vunpack.c.h.b16 %v242
      %v1119 = vunpack.c.l.b16 %v243
      %v1120 = vunpack.c.h.b16 %v243
      %v1121 = vunpack.c.l.b16 %v244
      %v1122 = vunpack.c.h.b16 %v244
      %v1123 = vunpack.c.l.b16 %v245
      %v1124 = vunpack.c.h.b16 %v245
      %v1125 = vunpack.c.l.b16 %v246
      %v1126 = vunpack.c.h.b16 %v246
      %v1127 = vunpack.c.l.b16 %v247
      %v1128 = vunpack.c.h.b16 %v247
      %v1129 = vunpack.c.l.b16 %v248
      %v1130 = vunpack.c.h.b16 %v248
      %v1131 = vunpack.c.l.b16 %v249
      %v1132 = vunpack.c.h.b16 %v249
      %v1133 = vpack.c.b16 %v993, %v989
      %v1134 = vpack.c.b16 %v994, %v990
      %v1135 = vpack.c.b16 %v995, %v991
      %v1136 = vpack.c.b16 %v996, %v992
      %v1137 = vpack.c.b16 %v1001, %v997
      %v1138 = vpack.c.b16 %v1002, %v998
      %v1139 = vpack.c.b16 %v1003, %v999
      %v1140 = vpack.c.b16 %v1004, %v1000
      %v1141 = vpack.c.b16 %v1009, %v1005
      %v1142 = vpack.c.b16 %v1010, %v1006
      %v1143 = vpack.c.b16 %v1011, %v1007
      %v1144 = vpack.c.b16 %v1012, %v1008
      %v1145 = vpack.c.b16 %v1017, %v1013
      %v1146 = vpack.c.b16 %v1018, %v1014
      %v1147 = vpack.c.b16 %v1019, %v1015
      %v1148 = vpack.c.b16 %v1020, %v1016
      %v1149 = vpack.c.b16 %v1025, %v1021
      %v1150 = vpack.c.b16 %v1026, %v1022
      %v1151 = vpack.c.b16 %v1027, %v1023
      %v1152 = vpack.c.b16 %v1028, %v1024
      %v1153 = vpack.c.b16 %v1033, %v1029
      %v1154 = vpack.c.b16 %v1034, %v1030
      %v1155 = vpack.c.b16 %v1035, %v1031
      %v1156 = vpack.c.b16 %v1036, %v1032
      %v1157 = vpack.c.b16 %v1041, %v1037
      %v1158 = vpack.c.b16 %v1042, %v1038
      %v1159 = vpack.c.b16 %v1043, %v1039
      %v1160 = vpack.c.b16 %v1044, %v1040
      %v1161 = vpack.c.b16 %v1049, %v1045
      %v1162 = vpack.c.b16 %v1050, %v1046
      %v1163 = vpack.c.b16 %v1051, %v1047
      %v1164 = vpack.c.b16 %v1052, %v1048
      %v1165 = vpack.c.b16 %v1057, %v1053
      %v1166 = vpack.c.b16 %v1058, %v1054
      %v1167 = vpack.c.b16 %v1059, %v1055
      %v1168 = vpack.c.b16 %v1060, %v1056
      %v1169 = vpack.c.b16 %v1065, %v1061
      %v1170 = vpack.c.b16 %v1066, %v1062
      %v1171 = vpack.c.b16 %v1067, %v1063
      %v1172 = vpack.c.b16 %v1068, %v1064
      %v1173 = vpack.c.b16 %v1073, %v1069
      %v1174 = vpack.c.b16 %v1074, %v1070
      %v1175 = vpack.c.b16 %v1075, %v1071
      %v1176 = vpack.c.b16 %v1076, %v1072
      %v1177 = vpack.c.b16 %v1081, %v1077
      %v1178 = vpack.c.b16 %v1082, %v1078
      %v1179 = vpack.c.b16 %v1083, %v1079
      %v1180 = vpack.c.b16 %v1084, %v1080
      %v1181 = vpack.c.b16 %v1089, %v1085
      %v1182 = vpack.c.b16 %v1090, %v1086
      %v1183 = vpack.c.b16 %v1091, %v1087
      %v1184 = vpack.c.b16 %v1092, %v1088
      %v1185 = vpack.c.b16 %v1097, %v1093
      %v1186 = vpack.c.b16 %v1098, %v1094
      %v1187 = vpack.c.b16 %v1099, %v1095
      %v1188 = vpack.c.b16 %v1100, %v1096
      %v1189 = vpack.c.b16 %v1105, %v1101
      %v1190 = vpack.c.b16 %v1106, %v1102
      %v1191 = vpack.c.b16 %v1107, %v1103
      %v1192 = vpack.c.b16 %v1108, %v1104
      %v1193 = vpack.c.b16 %v1113, %v1109
      %v1194 = vpack.c.b16 %v1114, %v1110
      %v1195 = vpack.c.b16 %v1115, %v1111
      %v1196 = vpack.c.b16 %v1116, %v1112
      %v1197 = vpack.c.b16 %v1121, %v1117
      %v1198 = vpack.c.b16 %v1122, %v1118
      %v1199 = vpack.c.b16 %v1123, %v1119
      %v1200 = vpack.c.b16 %v1124, %v1120
      %v1201 = vpack.c.b16 %v1129, %v1125
      %v1202 = vpack.c.b16 %v1130, %v1126
      %v1203 = vpack.c.b16 %v1131, %v1127
      %v1204 = vpack.c.b16 %v1132, %v1128
      %v1277 = vsel %vm743, %v340, 0
      %1279 = vmatpush.bf16.msra.mxu0 %v1161
      %1280 = vmatpush.bf16.msra.mxu0 %v1157
      %1281 = vmatpush.bf16.msra.mxu0 %v1153
      %1282 = vmatpush.bf16.msra.mxu0 %v1149
      %1283 = vmatpush.bf16.msra.mxu0 %v1145
      %1284 = vmatpush.bf16.msra.mxu0 %v1141
      %1285 = vmatpush.bf16.msra.mxu0 %v1137
      %1286 = vmatpush.bf16.msra.mxu0 %v1133
      %1287 = vmatmul.bf16.gmra.mxu0 %v338
      %v1288 = vpop.f32.mrf.mxu0
      %v1289 = vadd.f32 %v785, %v1288
      %v1290 = vpop.f32.mrf.mxu0
      %v1291 = vadd.f32 %v787, %v1290
      %1292 = vdwg.mxu0
      %1293 = vmatpush.bf16.msra.mxu0 %v1193
      %1294 = vmatpush.bf16.msra.mxu0 %v1189
      %1295 = vmatpush.bf16.msra.mxu0 %v1185
      %1296 = vmatpush.bf16.msra.mxu0 %v1181
      %1297 = vmatpush.bf16.msra.mxu0 %v1177
      %1298 = vmatpush.bf16.msra.mxu0 %v1173
      %1299 = vmatpush.bf16.msra.mxu0 %v1169
      %1300 = vmatpush.bf16.msra.mxu0 %v1165
      %1301 = vmatmul.bf16.gmra.mxu0 %v339
      %v1302 = vpop.f32.mrf.mxu0
      %v1303 = vadd.f32 %v1289, %v1302
      %v1304 = vpop.f32.mrf.mxu0
      %v1305 = vadd.f32 %v1291, %v1304
      %1306 = vdwg.mxu0
      %1307 = vmatpush.bf16.msra.mxu0 0
      %1308 = vmatpush.bf16.msra.mxu0 0
      %1309 = vmatpush.bf16.msra.mxu0 0
      %1310 = vmatpush.bf16.msra.mxu0 0
      %1311 = vmatpush.bf16.msra.mxu0 0
      %1312 = vmatpush.bf16.msra.mxu0 0
      %1313 = vmatpush.bf16.msra.mxu0 %v1201
      %1314 = vmatpush.bf16.msra.mxu0 %v1197
      %1315 = vmatmul.bf16.gmra.mxu0 %v1277
      %v1316 = vpop.f32.mrf.mxu0
      %v1317 = vadd.f32 %v1303, %v1316
      %v1318 = vpop.f32.mrf.mxu0
      %v1319 = vadd.f32 %v1305, %v1318
      %1320 = vdwg.mxu0
      %1321 = vmatpush.bf16.msra.mxu0 %v1162
      %1322 = vmatpush.bf16.msra.mxu0 %v1158
      %1323 = vmatpush.bf16.msra.mxu0 %v1154
      %1324 = vmatpush.bf16.msra.mxu0 %v1150
      %1325 = vmatpush.bf16.msra.mxu0 %v1146
      %1326 = vmatpush.bf16.msra.mxu0 %v1142
      %1327 = vmatpush.bf16.msra.mxu0 %v1138
      %1328 = vmatpush.bf16.msra.mxu0 %v1134
      %1329 = vmatmul.bf16.gmra.mxu0 %v338
      %v1330 = vpop.f32.mrf.mxu0
      %v1331 = vadd.f32 %v827, %v1330
      %v1332 = vpop.f32.mrf.mxu0
      %v1333 = vadd.f32 %v829, %v1332
      %1334 = vdwg.mxu0
      %1335 = vmatpush.bf16.msra.mxu0 %v1194
      %1336 = vmatpush.bf16.msra.mxu0 %v1190
      %1337 = vmatpush.bf16.msra.mxu0 %v1186
      %1338 = vmatpush.bf16.msra.mxu0 %v1182
      %1339 = vmatpush.bf16.msra.mxu0 %v1178
      %1340 = vmatpush.bf16.msra.mxu0 %v1174
      %1341 = vmatpush.bf16.msra.mxu0 %v1170
      %1342 = vmatpush.bf16.msra.mxu0 %v1166
      %1343 = vmatmul.bf16.gmra.mxu0 %v339
      %v1344 = vpop.f32.mrf.mxu0
      %v1345 = vadd.f32 %v1331, %v1344
      %v1346 = vpop.f32.mrf.mxu0
      %v1347 = vadd.f32 %v1333, %v1346
      %1348 = vdwg.mxu0
      %1349 = vmatpush.bf16.msra.mxu0 0
      %1350 = vmatpush.bf16.msra.mxu0 0
      %1351 = vmatpush.bf16.msra.mxu0 0
      %1352 = vmatpush.bf16.msra.mxu0 0
      %1353 = vmatpush.bf16.msra.mxu0 0
      %1354 = vmatpush.bf16.msra.mxu0 0
      %1355 = vmatpush.bf16.msra.mxu0 %v1202
      %1356 = vmatpush.bf16.msra.mxu0 %v1198
      %1357 = vmatmul.bf16.gmra.mxu0 %v1277
      %v1358 = vpop.f32.mrf.mxu0
      %v1359 = vadd.f32 %v1345, %v1358
      %v1360 = vpop.f32.mrf.mxu0
      %v1361 = vadd.f32 %v1347, %v1360
      %1362 = vdwg.mxu0
      %1363 = vmatpush.bf16.msra.mxu0 %v1163
      %1364 = vmatpush.bf16.msra.mxu0 %v1159
      %1365 = vmatpush.bf16.msra.mxu0 %v1155
      %1366 = vmatpush.bf16.msra.mxu0 %v1151
      %1367 = vmatpush.bf16.msra.mxu0 %v1147
      %1368 = vmatpush.bf16.msra.mxu0 %v1143
      %1369 = vmatpush.bf16.msra.mxu0 %v1139
      %1370 = vmatpush.bf16.msra.mxu0 %v1135
      %1371 = vmatmul.bf16.gmra.mxu0 %v338
      %v1372 = vpop.f32.mrf.mxu0
      %v1373 = vadd.f32 %v869, %v1372
      %v1374 = vpop.f32.mrf.mxu0
      %v1375 = vadd.f32 %v871, %v1374
      %1376 = vdwg.mxu0
      %1377 = vmatpush.bf16.msra.mxu0 %v1195
      %1378 = vmatpush.bf16.msra.mxu0 %v1191
      %1379 = vmatpush.bf16.msra.mxu0 %v1187
      %1380 = vmatpush.bf16.msra.mxu0 %v1183
      %1381 = vmatpush.bf16.msra.mxu0 %v1179
      %1382 = vmatpush.bf16.msra.mxu0 %v1175
      %1383 = vmatpush.bf16.msra.mxu0 %v1171
      %1384 = vmatpush.bf16.msra.mxu0 %v1167
      %1385 = vmatmul.bf16.gmra.mxu0 %v339
      %v1386 = vpop.f32.mrf.mxu0
      %v1387 = vadd.f32 %v1373, %v1386
      %v1388 = vpop.f32.mrf.mxu0
      %v1389 = vadd.f32 %v1375, %v1388
      %1390 = vdwg.mxu0
      %1391 = vmatpush.bf16.msra.mxu0 0
      %1392 = vmatpush.bf16.msra.mxu0 0
      %1393 = vmatpush.bf16.msra.mxu0 0
      %1394 = vmatpush.bf16.msra.mxu0 0
      %1395 = vmatpush.bf16.msra.mxu0 0
      %1396 = vmatpush.bf16.msra.mxu0 0
      %1397 = vmatpush.bf16.msra.mxu0 %v1203
      %1398 = vmatpush.bf16.msra.mxu0 %v1199
      %1399 = vmatmul.bf16.gmra.mxu0 %v1277
      %v1400 = vpop.f32.mrf.mxu0
      %v1401 = vadd.f32 %v1387, %v1400
      %v1402 = vpop.f32.mrf.mxu0
      %v1403 = vadd.f32 %v1389, %v1402
      %1404 = vdwg.mxu0
      %1405 = vmatpush.bf16.msra.mxu0 %v1164
      %1406 = vmatpush.bf16.msra.mxu0 %v1160
      %1407 = vmatpush.bf16.msra.mxu0 %v1156
      %1408 = vmatpush.bf16.msra.mxu0 %v1152
      %1409 = vmatpush.bf16.msra.mxu0 %v1148
      %1410 = vmatpush.bf16.msra.mxu0 %v1144
      %1411 = vmatpush.bf16.msra.mxu0 %v1140
      %1412 = vmatpush.bf16.msra.mxu0 %v1136
      %1413 = vmatmul.bf16.gmra.mxu0 %v338
      %v1414 = vpop.f32.mrf.mxu0
      %v1415 = vadd.f32 %v911, %v1414
      %v1416 = vpop.f32.mrf.mxu0
      %v1417 = vadd.f32 %v913, %v1416
      %1418 = vdwg.mxu0
      %1419 = vmatpush.bf16.msra.mxu0 %v1196
      %1420 = vmatpush.bf16.msra.mxu0 %v1192
      %1421 = vmatpush.bf16.msra.mxu0 %v1188
      %1422 = vmatpush.bf16.msra.mxu0 %v1184
      %1423 = vmatpush.bf16.msra.mxu0 %v1180
      %1424 = vmatpush.bf16.msra.mxu0 %v1176
      %1425 = vmatpush.bf16.msra.mxu0 %v1172
      %1426 = vmatpush.bf16.msra.mxu0 %v1168
      %1427 = vmatmul.bf16.gmra.mxu0 %v339
      %v1428 = vpop.f32.mrf.mxu0
      %v1429 = vadd.f32 %v1415, %v1428
      %v1430 = vpop.f32.mrf.mxu0
      %v1431 = vadd.f32 %v1417, %v1430
      %1432 = vdwg.mxu0
      %1433 = vmatpush.bf16.msra.mxu0 0
      %1434 = vmatpush.bf16.msra.mxu0 0
      %1435 = vmatpush.bf16.msra.mxu0 0
      %1436 = vmatpush.bf16.msra.mxu0 0
      %1437 = vmatpush.bf16.msra.mxu0 0
      %1438 = vmatpush.bf16.msra.mxu0 0
      %1439 = vmatpush.bf16.msra.mxu0 %v1204
      %1440 = vmatpush.bf16.msra.mxu0 %v1200
      %1441 = vmatmul.bf16.gmra.mxu0 %v1277
      %v1442 = vpop.f32.mrf.mxu0
      %v1443 = vadd.f32 %v1429, %v1442
      %v1444 = vpop.f32.mrf.mxu0
      %v1445 = vadd.f32 %v1431, %v1444
      %1446 = vdwg.mxu0
      %s1447 = scalar_lea.vmem %s1, 1152
      %v1448 = vld [vmem:[%s1447] sm:$0xff]
      %v1449 = vld [vmem:[%s1447 + $0x8] sm:$0xff]
      %v1450 = vld [vmem:[%s1447 + $0x10] sm:$0xff]
      %v1451 = vld [vmem:[%s1447 + $0x18] sm:$0xff]
      %v1452 = vld [vmem:[%s1447 + $0x20] sm:$0xff]
      %v1453 = vld [vmem:[%s1447 + $0x28] sm:$0xff]
      %v1454 = vld [vmem:[%s1447 + $0x30] sm:$0xff]
      %v1455 = vld [vmem:[%s1447 + $0x38] sm:$0xff]
      %v1456 = vld [vmem:[%s1447 + $0x40] sm:$0xff]
      %v1457 = vld [vmem:[%s1447 + $0x48] sm:$0xff]
      %v1458 = vld [vmem:[%s1447 + $0x50] sm:$0xff]
      %v1459 = vld [vmem:[%s1447 + $0x58] sm:$0xff]
      %v1460 = vld [vmem:[%s1447 + $0x60] sm:$0xff]
      %v1461 = vld [vmem:[%s1447 + $0x68] sm:$0xff]
      %v1462 = vld [vmem:[%s1447 + $0x70] sm:$0xff]
      %v1463 = vld [vmem:[%s1447 + $0x78] sm:$0xff]
      %v1464 = vld [vmem:[%s1447 + $0x80] sm:$0xff]
      %v1465 = vld [vmem:[%s1447 + $0x88] sm:$0xff]
      %v1466 = vld [vmem:[%s1447 + $0x90] sm:$0xff]
      %v1467 = vld [vmem:[%s1447 + $0x98] sm:$0xff]
      %v1468 = vld [vmem:[%s1447 + $0xa0] sm:$0xff]
      %v1469 = vld [vmem:[%s1447 + $0xa8] sm:$0xff]
      %v1470 = vld [vmem:[%s1447 + $0xb0] sm:$0xff]
      %v1471 = vld [vmem:[%s1447 + $0xb8] sm:$0xff]
      %v1472 = vld [vmem:[%s1447 + $0xc0] sm:$0xff]
      %v1473 = vld [vmem:[%s1447 + $0xc8] sm:$0xff]
      %v1474 = vld [vmem:[%s1447 + $0xd0] sm:$0xff]
      %v1475 = vld [vmem:[%s1447 + $0xd8] sm:$0xff]
      %v1476 = vld [vmem:[%s1447 + $0xe0] sm:$0xff]
      %v1477 = vld [vmem:[%s1447 + $0xe8] sm:$0xff]
      %v1478 = vld [vmem:[%s1447 + $0xf0] sm:$0xff]
      %v1479 = vld [vmem:[%s1447 + $0xf8] sm:$0xff]
      %v1480 = vld [vmem:[%s1447 + $0x100] sm:$0xff]
      %v1481 = vld [vmem:[%s1447 + $0x108] sm:$0xff]
      %v1482 = vld [vmem:[%s1447 + $0x110] sm:$0xff]
      %v1483 = vld [vmem:[%s1447 + $0x118] sm:$0xff]
      %v1484 = vld [vmem:[%s1447 + $0x120] sm:$0xff]
      %v1485 = vld [vmem:[%s1447 + $0x128] sm:$0xff]
      %v1486 = vld [vmem:[%s1447 + $0x130] sm:$0xff]
      %v1487 = vld [vmem:[%s1447 + $0x138] sm:$0xff]
      %v1488 = vld [vmem:[%s1447 + $0x140] sm:$0xff]
      %v1489 = vld [vmem:[%s1447 + $0x148] sm:$0xff]
      %v1490 = vld [vmem:[%s1447 + $0x150] sm:$0xff]
      %v1491 = vld [vmem:[%s1447 + $0x158] sm:$0xff]
      %v1492 = vld [vmem:[%s1447 + $0x160] sm:$0xff]
      %v1493 = vld [vmem:[%s1447 + $0x168] sm:$0xff]
      %v1494 = vld [vmem:[%s1447 + $0x170] sm:$0xff]
      %v1495 = vld [vmem:[%s1447 + $0x178] sm:$0xff]
      %v1496 = vld [vmem:[%s1447 + $0x180] sm:$0xff]
      %v1497 = vld [vmem:[%s1447 + $0x188] sm:$0xff]
      %v1498 = vld [vmem:[%s1447 + $0x190] sm:$0xff]
      %v1499 = vld [vmem:[%s1447 + $0x198] sm:$0xff]
      %v1500 = vld [vmem:[%s1447 + $0x1a0] sm:$0xff]
      %v1501 = vld [vmem:[%s1447 + $0x1a8] sm:$0xff]
      %v1502 = vld [vmem:[%s1447 + $0x1b0] sm:$0xff]
      %v1503 = vld [vmem:[%s1447 + $0x1b8] sm:$0xff]
      %v1504 = vld [vmem:[%s1447 + $0x1c0] sm:$0xff]
      %v1505 = vld [vmem:[%s1447 + $0x1c8] sm:$0xff]
      %v1506 = vld [vmem:[%s1447 + $0x1d0] sm:$0xff]
      %v1507 = vld [vmem:[%s1447 + $0x1d8] sm:$0xff]
      %v1508 = vld [vmem:[%s1447 + $0x1e0] sm:$0xff]
      %v1509 = vld [vmem:[%s1447 + $0x1e8] sm:$0xff]
      %v1510 = vld [vmem:[%s1447 + $0x1f0] sm:$0xff]
      %v1511 = vld [vmem:[%s1447 + $0x1f8] sm:$0xff]
      %v1512 = vld [vmem:[%s1447 + $0x200] sm:$0xff]
      %v1513 = vld [vmem:[%s1447 + $0x208] sm:$0xff]
      %v1514 = vld [vmem:[%s1447 + $0x210] sm:$0xff]
      %v1515 = vld [vmem:[%s1447 + $0x218] sm:$0xff]
      %v1516 = vld [vmem:[%s1447 + $0x220] sm:$0xff]
      %v1517 = vld [vmem:[%s1447 + $0x228] sm:$0xff]
      %v1518 = vld [vmem:[%s1447 + $0x230] sm:$0xff]
      %v1519 = vld [vmem:[%s1447 + $0x238] sm:$0xff]
      %vm1520 = vcmask 1046528
      %v1521 = vrot.slane %v338, 1
      %v1522 = vrot.slane %v341, 1
      %v1523 = vsel %vm1520, %v1521, %v1522
      %v1524 = vrot.slane %v339, 1
      %v1525 = vrot.slane %v342, 1
      %v1526 = vsel %vm1520, %v1524, %v1525
      %v1527 = vrot.slane %v340, 1
      %v1528 = vrot.slane %v343, 1
      %v1529 = vsel %vm1520, %v1527, %v1528
      %v1604 = vunpack.c.l.b16 %v1448
      %v1605 = vunpack.c.h.b16 %v1448
      %v1606 = vunpack.c.l.b16 %v1449
      %v1607 = vunpack.c.h.b16 %v1449
      %v1608 = vunpack.c.l.b16 %v1450
      %v1609 = vunpack.c.h.b16 %v1450
      %v1610 = vunpack.c.l.b16 %v1451
      %v1611 = vunpack.c.h.b16 %v1451
      %v1612 = vunpack.c.l.b16 %v1452
      %v1613 = vunpack.c.h.b16 %v1452
      %v1614 = vunpack.c.l.b16 %v1453
      %v1615 = vunpack.c.h.b16 %v1453
      %v1616 = vunpack.c.l.b16 %v1454
      %v1617 = vunpack.c.h.b16 %v1454
      %v1618 = vunpack.c.l.b16 %v1455
      %v1619 = vunpack.c.h.b16 %v1455
      %v1620 = vunpack.c.l.b16 %v1456
      %v1621 = vunpack.c.h.b16 %v1456
      %v1622 = vunpack.c.l.b16 %v1457
      %v1623 = vunpack.c.h.b16 %v1457
      %v1624 = vunpack.c.l.b16 %v1458
      %v1625 = vunpack.c.h.b16 %v1458
      %v1626 = vunpack.c.l.b16 %v1459
      %v1627 = vunpack.c.h.b16 %v1459
      %v1628 = vunpack.c.l.b16 %v1460
      %v1629 = vunpack.c.h.b16 %v1460
      %v1630 = vunpack.c.l.b16 %v1461
      %v1631 = vunpack.c.h.b16 %v1461
      %v1632 = vunpack.c.l.b16 %v1462
      %v1633 = vunpack.c.h.b16 %v1462
      %v1634 = vunpack.c.l.b16 %v1463
      %v1635 = vunpack.c.h.b16 %v1463
      %v1636 = vunpack.c.l.b16 %v1464
      %v1637 = vunpack.c.h.b16 %v1464
      %v1638 = vunpack.c.l.b16 %v1465
      %v1639 = vunpack.c.h.b16 %v1465
      %v1640 = vunpack.c.l.b16 %v1466
      %v1641 = vunpack.c.h.b16 %v1466
      %v1642 = vunpack.c.l.b16 %v1467
      %v1643 = vunpack.c.h.b16 %v1467
      %v1644 = vunpack.c.l.b16 %v1468
      %v1645 = vunpack.c.h.b16 %v1468
      %v1646 = vunpack.c.l.b16 %v1469
      %v1647 = vunpack.c.h.b16 %v1469
      %v1648 = vunpack.c.l.b16 %v1470
      %v1649 = vunpack.c.h.b16 %v1470
      %v1650 = vunpack.c.l.b16 %v1471
      %v1651 = vunpack.c.h.b16 %v1471
      %v1652 = vunpack.c.l.b16 %v1472
      %v1653 = vunpack.c.h.b16 %v1472
      %v1654 = vunpack.c.l.b16 %v1473
      %v1655 = vunpack.c.h.b16 %v1473
      %v1656 = vunpack.c.l.b16 %v1474
      %v1657 = vunpack.c.h.b16 %v1474
      %v1658 = vunpack.c.l.b16 %v1475
      %v1659 = vunpack.c.h.b16 %v1475
      %v1660 = vunpack.c.l.b16 %v1476
      %v1661 = vunpack.c.h.b16 %v1476
      %v1662 = vunpack.c.l.b16 %v1477
      %v1663 = vunpack.c.h.b16 %v1477
      %v1664 = vunpack.c.l.b16 %v1478
      %v1665 = vunpack.c.h.b16 %v1478
      %v1666 = vunpack.c.l.b16 %v1479
      %v1667 = vunpack.c.h.b16 %v1479
      %v1668 = vunpack.c.l.b16 %v1480
      %v1669 = vunpack.c.h.b16 %v1480
      %v1670 = vunpack.c.l.b16 %v1481
      %v1671 = vunpack.c.h.b16 %v1481
      %v1672 = vunpack.c.l.b16 %v1482
      %v1673 = vunpack.c.h.b16 %v1482
      %v1674 = vunpack.c.l.b16 %v1483
      %v1675 = vunpack.c.h.b16 %v1483
      %v1676 = vunpack.c.l.b16 %v1484
      %v1677 = vunpack.c.h.b16 %v1484
      %v1678 = vunpack.c.l.b16 %v1485
      %v1679 = vunpack.c.h.b16 %v1485
      %v1680 = vunpack.c.l.b16 %v1486
      %v1681 = vunpack.c.h.b16 %v1486
      %v1682 = vunpack.c.l.b16 %v1487
      %v1683 = vunpack.c.h.b16 %v1487
      %v1684 = vunpack.c.l.b16 %v1488
      %v1685 = vunpack.c.h.b16 %v1488
      %v1686 = vunpack.c.l.b16 %v1489
      %v1687 = vunpack.c.h.b16 %v1489
      %v1688 = vunpack.c.l.b16 %v1490
      %v1689 = vunpack.c.h.b16 %v1490
      %v1690 = vunpack.c.l.b16 %v1491
      %v1691 = vunpack.c.h.b16 %v1491
      %v1692 = vunpack.c.l.b16 %v1492
      %v1693 = vunpack.c.h.b16 %v1492
      %v1694 = vunpack.c.l.b16 %v1493
      %v1695 = vunpack.c.h.b16 %v1493
      %v1696 = vunpack.c.l.b16 %v1494
      %v1697 = vunpack.c.h.b16 %v1494
      %v1698 = vunpack.c.l.b16 %v1495
      %v1699 = vunpack.c.h.b16 %v1495
      %v1700 = vunpack.c.l.b16 %v1496
      %v1701 = vunpack.c.h.b16 %v1496
      %v1702 = vunpack.c.l.b16 %v1497
      %v1703 = vunpack.c.h.b16 %v1497
      %v1704 = vunpack.c.l.b16 %v1498
      %v1705 = vunpack.c.h.b16 %v1498
      %v1706 = vunpack.c.l.b16 %v1499
      %v1707 = vunpack.c.h.b16 %v1499
      %v1708 = vunpack.c.l.b16 %v1500
      %v1709 = vunpack.c.h.b16 %v1500
      %v1710 = vunpack.c.l.b16 %v1501
      %v1711 = vunpack.c.h.b16 %v1501
      %v1712 = vunpack.c.l.b16 %v1502
      %v1713 = vunpack.c.h.b16 %v1502
      %v1714 = vunpack.c.l.b16 %v1503
      %v1715 = vunpack.c.h.b16 %v1503
      %v1716 = vunpack.c.l.b16 %v1504
      %v1717 = vunpack.c.h.b16 %v1504
      %v1718 = vunpack.c.l.b16 %v1505
      %v1719 = vunpack.c.h.b16 %v1505
      %v1720 = vunpack.c.l.b16 %v1506
      %v1721 = vunpack.c.h.b16 %v1506
      %v1722 = vunpack.c.l.b16 %v1507
      %v1723 = vunpack.c.h.b16 %v1507
      %v1724 = vunpack.c.l.b16 %v1508
      %v1725 = vunpack.c.h.b16 %v1508
      %v1726 = vunpack.c.l.b16 %v1509
      %v1727 = vunpack.c.h.b16 %v1509
      %v1728 = vunpack.c.l.b16 %v1510
      %v1729 = vunpack.c.h.b16 %v1510
      %v1730 = vunpack.c.l.b16 %v1511
      %v1731 = vunpack.c.h.b16 %v1511
      %v1732 = vunpack.c.l.b16 %v1512
      %v1733 = vunpack.c.h.b16 %v1512
      %v1734 = vunpack.c.l.b16 %v1513
      %v1735 = vunpack.c.h.b16 %v1513
      %v1736 = vunpack.c.l.b16 %v1514
      %v1737 = vunpack.c.h.b16 %v1514
      %v1738 = vunpack.c.l.b16 %v1515
      %v1739 = vunpack.c.h.b16 %v1515
      %v1740 = vunpack.c.l.b16 %v1516
      %v1741 = vunpack.c.h.b16 %v1516
      %v1742 = vunpack.c.l.b16 %v1517
      %v1743 = vunpack.c.h.b16 %v1517
      %v1744 = vunpack.c.l.b16 %v1518
      %v1745 = vunpack.c.h.b16 %v1518
      %v1746 = vunpack.c.l.b16 %v1519
      %v1747 = vunpack.c.h.b16 %v1519
      %v1748 = vpack.c.b16 %v1608, %v1604
      %v1749 = vpack.c.b16 %v1609, %v1605
      %v1750 = vpack.c.b16 %v1610, %v1606
      %v1751 = vpack.c.b16 %v1611, %v1607
      %v1752 = vpack.c.b16 %v1616, %v1612
      %v1753 = vpack.c.b16 %v1617, %v1613
      %v1754 = vpack.c.b16 %v1618, %v1614
      %v1755 = vpack.c.b16 %v1619, %v1615
      %v1756 = vpack.c.b16 %v1624, %v1620
      %v1757 = vpack.c.b16 %v1625, %v1621
      %v1758 = vpack.c.b16 %v1626, %v1622
      %v1759 = vpack.c.b16 %v1627, %v1623
      %v1760 = vpack.c.b16 %v1632, %v1628
      %v1761 = vpack.c.b16 %v1633, %v1629
      %v1762 = vpack.c.b16 %v1634, %v1630
      %v1763 = vpack.c.b16 %v1635, %v1631
      %v1764 = vpack.c.b16 %v1640, %v1636
      %v1765 = vpack.c.b16 %v1641, %v1637
      %v1766 = vpack.c.b16 %v1642, %v1638
      %v1767 = vpack.c.b16 %v1643, %v1639
      %v1768 = vpack.c.b16 %v1648, %v1644
      %v1769 = vpack.c.b16 %v1649, %v1645
      %v1770 = vpack.c.b16 %v1650, %v1646
      %v1771 = vpack.c.b16 %v1651, %v1647
      %v1772 = vpack.c.b16 %v1656, %v1652
      %v1773 = vpack.c.b16 %v1657, %v1653
      %v1774 = vpack.c.b16 %v1658, %v1654
      %v1775 = vpack.c.b16 %v1659, %v1655
      %v1776 = vpack.c.b16 %v1664, %v1660
      %v1777 = vpack.c.b16 %v1665, %v1661
      %v1778 = vpack.c.b16 %v1666, %v1662
      %v1779 = vpack.c.b16 %v1667, %v1663
      %v1780 = vpack.c.b16 %v1672, %v1668
      %v1781 = vpack.c.b16 %v1673, %v1669
      %v1782 = vpack.c.b16 %v1674, %v1670
      %v1783 = vpack.c.b16 %v1675, %v1671
      %v1784 = vpack.c.b16 %v1680, %v1676
      %v1785 = vpack.c.b16 %v1681, %v1677
      %v1786 = vpack.c.b16 %v1682, %v1678
      %v1787 = vpack.c.b16 %v1683, %v1679
      %v1788 = vpack.c.b16 %v1688, %v1684
      %v1789 = vpack.c.b16 %v1689, %v1685
      %v1790 = vpack.c.b16 %v1690, %v1686
      %v1791 = vpack.c.b16 %v1691, %v1687
      %v1792 = vpack.c.b16 %v1696, %v1692
      %v1793 = vpack.c.b16 %v1697, %v1693
      %v1794 = vpack.c.b16 %v1698, %v1694
      %v1795 = vpack.c.b16 %v1699, %v1695
      %v1796 = vpack.c.b16 %v1704, %v1700
      %v1797 = vpack.c.b16 %v1705, %v1701
      %v1798 = vpack.c.b16 %v1706, %v1702
      %v1799 = vpack.c.b16 %v1707, %v1703
      %v1800 = vpack.c.b16 %v1712, %v1708
      %v1801 = vpack.c.b16 %v1713, %v1709
      %v1802 = vpack.c.b16 %v1714, %v1710
      %v1803 = vpack.c.b16 %v1715, %v1711
      %v1804 = vpack.c.b16 %v1720, %v1716
      %v1805 = vpack.c.b16 %v1721, %v1717
      %v1806 = vpack.c.b16 %v1722, %v1718
      %v1807 = vpack.c.b16 %v1723, %v1719
      %v1808 = vpack.c.b16 %v1728, %v1724
      %v1809 = vpack.c.b16 %v1729, %v1725
      %v1810 = vpack.c.b16 %v1730, %v1726
      %v1811 = vpack.c.b16 %v1731, %v1727
      %v1812 = vpack.c.b16 %v1736, %v1732
      %v1813 = vpack.c.b16 %v1737, %v1733
      %v1814 = vpack.c.b16 %v1738, %v1734
      %v1815 = vpack.c.b16 %v1739, %v1735
      %v1816 = vpack.c.b16 %v1744, %v1740
      %v1817 = vpack.c.b16 %v1745, %v1741
      %v1818 = vpack.c.b16 %v1746, %v1742
      %v1819 = vpack.c.b16 %v1747, %v1743
      %v1893 = vsel %vm743, %v1529, 0
      %1895 = vmatpush.bf16.msra.mxu0 %v1776
      %1896 = vmatpush.bf16.msra.mxu0 %v1772
      %1897 = vmatpush.bf16.msra.mxu0 %v1768
      %1898 = vmatpush.bf16.msra.mxu0 %v1764
      %1899 = vmatpush.bf16.msra.mxu0 %v1760
      %1900 = vmatpush.bf16.msra.mxu0 %v1756
      %1901 = vmatpush.bf16.msra.mxu0 %v1752
      %1902 = vmatpush.bf16.msra.mxu0 %v1748
      %1903 = vmatmul.bf16.gmra.mxu0 %v1523
      %v1904 = vpop.f32.mrf.mxu0
      %v1905 = vadd.f32 0.0, %v1904
      %v1906 = vpop.f32.mrf.mxu0
      %v1907 = vadd.f32 0.0, %v1906
      %1908 = vdwg.mxu0
      %1909 = vmatpush.bf16.msra.mxu0 %v1808
      %1910 = vmatpush.bf16.msra.mxu0 %v1804
      %1911 = vmatpush.bf16.msra.mxu0 %v1800
      %1912 = vmatpush.bf16.msra.mxu0 %v1796
      %1913 = vmatpush.bf16.msra.mxu0 %v1792
      %1914 = vmatpush.bf16.msra.mxu0 %v1788
      %1915 = vmatpush.bf16.msra.mxu0 %v1784
      %1916 = vmatpush.bf16.msra.mxu0 %v1780
      %1917 = vmatmul.bf16.gmra.mxu0 %v1526
      %v1918 = vpop.f32.mrf.mxu0
      %v1919 = vadd.f32 %v1905, %v1918
      %v1920 = vpop.f32.mrf.mxu0
      %v1921 = vadd.f32 %v1907, %v1920
      %1922 = vdwg.mxu0
      %1923 = vmatpush.bf16.msra.mxu0 0
      %1924 = vmatpush.bf16.msra.mxu0 0
      %1925 = vmatpush.bf16.msra.mxu0 0
      %1926 = vmatpush.bf16.msra.mxu0 0
      %1927 = vmatpush.bf16.msra.mxu0 0
      %1928 = vmatpush.bf16.msra.mxu0 0
      %1929 = vmatpush.bf16.msra.mxu0 %v1816
      %1930 = vmatpush.bf16.msra.mxu0 %v1812
      %1931 = vmatmul.bf16.gmra.mxu0 %v1893
      %v1932 = vpop.f32.mrf.mxu0
      %v1933 = vadd.f32 %v1919, %v1932
      %v1934 = vpop.f32.mrf.mxu0
      %v1935 = vadd.f32 %v1921, %v1934
      %1936 = vdwg.mxu0
      %1937 = vmatpush.bf16.msra.mxu0 %v1777
      %1938 = vmatpush.bf16.msra.mxu0 %v1773
      %1939 = vmatpush.bf16.msra.mxu0 %v1769
      %1940 = vmatpush.bf16.msra.mxu0 %v1765
      %1941 = vmatpush.bf16.msra.mxu0 %v1761
      %1942 = vmatpush.bf16.msra.mxu0 %v1757
      %1943 = vmatpush.bf16.msra.mxu0 %v1753
      %1944 = vmatpush.bf16.msra.mxu0 %v1749
      %1945 = vmatmul.bf16.gmra.mxu0 %v1523
      %v1946 = vpop.f32.mrf.mxu0
      %v1947 = vadd.f32 0.0, %v1946
      %v1948 = vpop.f32.mrf.mxu0
      %v1949 = vadd.f32 0.0, %v1948
      %1950 = vdwg.mxu0
      %1951 = vmatpush.bf16.msra.mxu0 %v1809
      %1952 = vmatpush.bf16.msra.mxu0 %v1805
      %1953 = vmatpush.bf16.msra.mxu0 %v1801
      %1954 = vmatpush.bf16.msra.mxu0 %v1797
      %1955 = vmatpush.bf16.msra.mxu0 %v1793
      %1956 = vmatpush.bf16.msra.mxu0 %v1789
      %1957 = vmatpush.bf16.msra.mxu0 %v1785
      %1958 = vmatpush.bf16.msra.mxu0 %v1781
      %1959 = vmatmul.bf16.gmra.mxu0 %v1526
      %v1960 = vpop.f32.mrf.mxu0
      %v1961 = vadd.f32 %v1947, %v1960
      %v1962 = vpop.f32.mrf.mxu0
      %v1963 = vadd.f32 %v1949, %v1962
      %1964 = vdwg.mxu0
      %1965 = vmatpush.bf16.msra.mxu0 0
      %1966 = vmatpush.bf16.msra.mxu0 0
      %1967 = vmatpush.bf16.msra.mxu0 0
      %1968 = vmatpush.bf16.msra.mxu0 0
      %1969 = vmatpush.bf16.msra.mxu0 0
      %1970 = vmatpush.bf16.msra.mxu0 0
      %1971 = vmatpush.bf16.msra.mxu0 %v1817
      %1972 = vmatpush.bf16.msra.mxu0 %v1813
      %1973 = vmatmul.bf16.gmra.mxu0 %v1893
      %v1974 = vpop.f32.mrf.mxu0
      %v1975 = vadd.f32 %v1961, %v1974
      %v1976 = vpop.f32.mrf.mxu0
      %v1977 = vadd.f32 %v1963, %v1976
      %1978 = vdwg.mxu0
      %1979 = vmatpush.bf16.msra.mxu0 %v1778
      %1980 = vmatpush.bf16.msra.mxu0 %v1774
      %1981 = vmatpush.bf16.msra.mxu0 %v1770
      %1982 = vmatpush.bf16.msra.mxu0 %v1766
      %1983 = vmatpush.bf16.msra.mxu0 %v1762
      %1984 = vmatpush.bf16.msra.mxu0 %v1758
      %1985 = vmatpush.bf16.msra.mxu0 %v1754
      %1986 = vmatpush.bf16.msra.mxu0 %v1750
      %1987 = vmatmul.bf16.gmra.mxu0 %v1523
      %v1988 = vpop.f32.mrf.mxu0
      %v1989 = vadd.f32 0.0, %v1988
      %v1990 = vpop.f32.mrf.mxu0
      %v1991 = vadd.f32 0.0, %v1990
      %1992 = vdwg.mxu0
      %1993 = vmatpush.bf16.msra.mxu0 %v1810
      %1994 = vmatpush.bf16.msra.mxu0 %v1806
      %1995 = vmatpush.bf16.msra.mxu0 %v1802
      %1996 = vmatpush.bf16.msra.mxu0 %v1798
      %1997 = vmatpush.bf16.msra.mxu0 %v1794
      %1998 = vmatpush.bf16.msra.mxu0 %v1790
      %1999 = vmatpush.bf16.msra.mxu0 %v1786
      %2000 = vmatpush.bf16.msra.mxu0 %v1782
      %2001 = vmatmul.bf16.gmra.mxu0 %v1526
      %v2002 = vpop.f32.mrf.mxu0
      %v2003 = vadd.f32 %v1989, %v2002
      %v2004 = vpop.f32.mrf.mxu0
      %v2005 = vadd.f32 %v1991, %v2004
      %2006 = vdwg.mxu0
      %2007 = vmatpush.bf16.msra.mxu0 0
      %2008 = vmatpush.bf16.msra.mxu0 0
      %2009 = vmatpush.bf16.msra.mxu0 0
      %2010 = vmatpush.bf16.msra.mxu0 0
      %2011 = vmatpush.bf16.msra.mxu0 0
      %2012 = vmatpush.bf16.msra.mxu0 0
      %2013 = vmatpush.bf16.msra.mxu0 %v1818
      %2014 = vmatpush.bf16.msra.mxu0 %v1814
      %2015 = vmatmul.bf16.gmra.mxu0 %v1893
      %v2016 = vpop.f32.mrf.mxu0
      %v2017 = vadd.f32 %v2003, %v2016
      %v2018 = vpop.f32.mrf.mxu0
      %v2019 = vadd.f32 %v2005, %v2018
      %2020 = vdwg.mxu0
      %2021 = vmatpush.bf16.msra.mxu0 %v1779
      %2022 = vmatpush.bf16.msra.mxu0 %v1775
      %2023 = vmatpush.bf16.msra.mxu0 %v1771
      %2024 = vmatpush.bf16.msra.mxu0 %v1767
      %2025 = vmatpush.bf16.msra.mxu0 %v1763
      %2026 = vmatpush.bf16.msra.mxu0 %v1759
      %2027 = vmatpush.bf16.msra.mxu0 %v1755
      %2028 = vmatpush.bf16.msra.mxu0 %v1751
      %2029 = vmatmul.bf16.gmra.mxu0 %v1523
      %v2030 = vpop.f32.mrf.mxu0
      %v2031 = vadd.f32 0.0, %v2030
      %v2032 = vpop.f32.mrf.mxu0
      %v2033 = vadd.f32 0.0, %v2032
      %2034 = vdwg.mxu0
      %2035 = vmatpush.bf16.msra.mxu0 %v1811
      %2036 = vmatpush.bf16.msra.mxu0 %v1807
      %2037 = vmatpush.bf16.msra.mxu0 %v1803
      %2038 = vmatpush.bf16.msra.mxu0 %v1799
      %2039 = vmatpush.bf16.msra.mxu0 %v1795
      %2040 = vmatpush.bf16.msra.mxu0 %v1791
      %2041 = vmatpush.bf16.msra.mxu0 %v1787
      %2042 = vmatpush.bf16.msra.mxu0 %v1783
      %2043 = vmatmul.bf16.gmra.mxu0 %v1526
      %v2044 = vpop.f32.mrf.mxu0
      %v2045 = vadd.f32 %v2031, %v2044
      %v2046 = vpop.f32.mrf.mxu0
      %v2047 = vadd.f32 %v2033, %v2046
      %2048 = vdwg.mxu0
      %2049 = vmatpush.bf16.msra.mxu0 0
      %2050 = vmatpush.bf16.msra.mxu0 0
      %2051 = vmatpush.bf16.msra.mxu0 0
      %2052 = vmatpush.bf16.msra.mxu0 0
      %2053 = vmatpush.bf16.msra.mxu0 0
      %2054 = vmatpush.bf16.msra.mxu0 0
      %2055 = vmatpush.bf16.msra.mxu0 %v1819
      %2056 = vmatpush.bf16.msra.mxu0 %v1815
      %2057 = vmatmul.bf16.gmra.mxu0 %v1893
      %v2058 = vpop.f32.mrf.mxu0
      %v2059 = vadd.f32 %v2045, %v2058
      %v2060 = vpop.f32.mrf.mxu0
      %v2061 = vadd.f32 %v2047, %v2060
      %2062 = vdwg.mxu0
      %v2063 = vadd.f32 %v1317, %v1933
      %v2064 = vadd.f32 %v1359, %v1975
      %v2065 = vadd.f32 %v1401, %v2017
      %v2066 = vadd.f32 %v1443, %v2059
      %v2067 = vadd.f32 %v1319, %v1935
      %v2068 = vadd.f32 %v1361, %v1977
      %v2069 = vadd.f32 %v1403, %v2019
      %v2070 = vadd.f32 %v1445, %v2061
      %v2071 = vld [vmem:[%s2] sm:$0xf]
      %v2073 = vperm.slane %v2071, 0
      %v2074 = vperm.slane %v2071, 1
      %v2075 = vperm.slane %v2071, 2
      %v2076 = vperm.slane %v2071, 3
      %v2081 = vadd.f32 %v2063, %v2073
      %v2082 = vadd.f32 %v2064, %v2074
      %v2083 = vadd.f32 %v2065, %v2075
      %v2084 = vadd.f32 %v2066, %v2076
      %v2085 = vadd.f32 %v2067, %v2073
      %v2086 = vadd.f32 %v2068, %v2074
      %v2087 = vadd.f32 %v2069, %v2075
      %v2088 = vadd.f32 %v2070, %v2076
      %2089 = vst [vmem:[%s170] sm:$0xff] %v2081
      %2090 = vst [vmem:[%s170 + $0x8] sm:$0xff] %v2082
      %2091 = vst [vmem:[%s170 + $0x10] sm:$0xff] %v2083
      %2092 = vst [vmem:[%s170 + $0x18] sm:$0xff] %v2084
      %2093 = vst [vmem:[%s170 + $0x20] sm:$0xff] %v2085
      %2094 = vst [vmem:[%s170 + $0x28] sm:$0xff] %v2086
      %2095 = vst [vmem:[%s170 + $0x30] sm:$0xff] %v2087
      %2096 = vst [vmem:[%s170 + $0x38] sm:$0xff] %v2088
      %p2097 = scmp.lt.s32.totalorder %s14, 1
      %s2098 = scalar_select %p2097, %s14, 1
      %s2099 = smul.addr %s2098, 8
      %s2100 = smul.addr %s2099, 8
      %s2101 = scalar_lea.vmem %s3, %s2100
      // Predicated region
      $region33: #{_lambda_.1} parent=31 // pred_check
        %p2102 = pneg %p100
      $region34: #{_lambda_.1} parent=31 // pred_check_branch
        %2104 = sbr.rel (%p2102) target = $region36
      $region35: #{_lambda_.1} parent=31 // pred_region
        _
      $region36: #{_lambda_.1} parent=31 // pred_fallthru
        _
    $region32: #{_lambda_.1} parent=5 // pred_fallthru
      _
    %p2105 = scmp.le.s32.totalorder 2, %s9
    // Predicated region
    $region37: #{_lambda_.1} parent=5 // pred_check
      %p2106 = pneg %p2105
    $region38: #{_lambda_.1} parent=5 // pred_check_branch
      %2108 = sbr.rel (%p2106) target = $region40
    $region39: #{_lambda_.1} parent=5 // pred_region
      %s2109 = ssub.s32 %s9, 2
      // Predicated region
      $region41: #{_lambda_.1} parent=39 // pred_check
        %p2110 = pneg %p106
      $region42: #{_lambda_.1} parent=39 // pred_check_branch
        %2112 = sbr.rel (%p2110) target = $region44
      $region43: #{_lambda_.1} parent=39 // pred_region
        %p2113 = scmp.lt.s32.totalorder %s15, 1
        %s2114 = scalar_select %p2113, %s15, 1
        %s2115 = smul.addr %s2114, 8
        %s2116 = smul.addr %s2115, 8
        %s2117 = scalar_lea.vmem %s3, %s2116
      $region44: #{_lambda_.1} parent=39 // pred_fallthru
        _
    $region40: #{_lambda_.1} parent=5 // pred_fallthru
      _
  $region6: #{_lambda_.1} parent=0 // loop_footer
    %s13 = sadd.s32 1, %s9
  $region7: #{_lambda_.1} parent=0 // loop_footer_branch
    %8 = sbr.rel target = $region3
  $region8: #{_lambda_.1} parent=0 // loop_exit
    _

</llo_original>
